<compile_context>
chip_gen: v6e
topology: v6e:2x2x1
jax: 0.10.0
libtpu: 0.0.40
codegen_flags: <defaults>
</compile_context>

<pallas_src>
import numpy as np
import jax
import jax.numpy as jnp
from jax.experimental import pallas as pl
from jax.experimental.pallas import tpu as pltpu


# ------------------------------ helpers --------------------------------------

def _round_up(x, m):
    return ((x + m - 1) // m) * m


# ----------------------------- Pallas kernel ---------------------------------

def _make_clip_kernel(n_mid, mid_relu_flags, r_pad):
    """Single-program kernel computing both encoder chains.

    Stacked weight slab w_ref (L, D_pad, D_pad) layout:
      [0            .. n_mid-1  ]  csi  MLP layers after the first
      [n_mid        .. 2*n_mid-1]  skel MLP layers after the first
      [2*n_mid                  ]  SharedMLP first layer (E->H, ReLU)   — run once on both chains
      [2*n_mid + 1              ]  csi  fused SharedMLP-out + projection (H->E)
      [2*n_mid + 2              ]  skel fused SharedMLP-out + projection (H->E)
    Biases in b_ref follow the same order; b0_ref holds the two first-layer biases.
    """
    sh_i = 2 * n_mid
    fc_i = 2 * n_mid + 1
    fs_i = 2 * n_mid + 2

    def layer(h, w, b, relu):
        h = jnp.dot(h.astype(jnp.bfloat16), w,
                    preferred_element_type=jnp.float32) + b
        return jnp.maximum(h, 0.0) if relu else h

    def kernel(csi_ref, skel_ref, csi_w0_ref, skel_w0_ref, b0_ref,
               w_ref, b_ref, out_ref):
        # First (input) layers — the only per-chain layers with distinct K dims.
        hc = layer(csi_ref[...], csi_w0_ref[...], b0_ref[0:1, :], True)
        hs = layer(skel_ref[...], skel_w0_ref[...], b0_ref[1:2, :], True)

        # Remaining per-chain MLP layers (statically unrolled).
        for i, relu in enumerate(mid_relu_flags):
            hc = layer(hc, w_ref[i], b_ref[i:i + 1, :], relu)
        for i, relu in enumerate(mid_relu_flags):
            hs = layer(hs, w_ref[n_mid + i], b_ref[n_mid + i:n_mid + i + 1, :], relu)

        # SharedMLP first layer once over both chains' rows (single matmul).
        h = jnp.concatenate([hc, hs], axis=0)                       # (2*r_pad, D_pad)
        h = layer(h, w_ref[sh_i], b_ref[sh_i:sh_i + 1, :], True)

        # Fused SharedMLP-output + per-chain projection.
        oc = layer(h[:r_pad], w_ref[fc_i], b_ref[fc_i:fc_i + 1, :], False)
        osk = layer(h[r_pad:], w_ref[fs_i], b_ref[fs_i:fs_i + 1, :], False)

        out_ref[:r_pad, :] = oc.astype(out_ref.dtype)
        out_ref[r_pad:, :] = osk.astype(out_ref.dtype)

    return kernel


# ------------------- one-time (init-time) weight preprocessing ----------------

def prepare_clip_params(params, step):
    """Hoisted out of the forward: fusion, zero-padding, bf16 cast, stacking."""
    apply_proj = step in (1, 2)

    mlp_csi = params["mlp_csi"]
    mlp_skel = params["mlp_skeleton"]
    (ws1, bs1), (ws2, bs2) = params["shared_mlp"]

    embed_dim = int(ws2.shape[1])
    hidden_dim = int(ws1.shape[1])
    d_pad = _round_up(max(embed_dim, hidden_dim), 128)

    def fuse_out(proj):
        if apply_proj:
            wp, bp = proj
            # (h @ Ws2 + bs2) @ Wp + bp  ==  h @ (Ws2 Wp) + (bs2 Wp + bp)
            return ws2 @ wp, bs2 @ wp + bp
        return ws2, bs2

    fused_c = fuse_out(params["csi_projection"])
    fused_s = fuse_out(params["skel_projection"])

    def pad_w(w):
        k, n = w.shape
        return (jnp.zeros((_round_up(k, 128), d_pad), jnp.float32)
                .at[:k, :n].set(w).astype(jnp.bfloat16))

    def pad_b(b):
        n = b.shape[-1]
        return jnp.zeros((1, d_pad), jnp.float32).at[:, :n].set(b.reshape(1, n))

    csi_w0, csi_b0 = mlp_csi[0]
    skel_w0, skel_b0 = mlp_skel[0]

    n_mid = len(mlp_csi) - 1                       # == mlp_layers
    mid_relu_flags = tuple([True] * (n_mid - 1) + [False])

    stacked = (list(mlp_csi[1:]) + list(mlp_skel[1:])
               + [(ws1, bs1), fused_c, fused_s])
    w_stack = jnp.stack([pad_w(w) for (w, _) in stacked], axis=0)   # (L, D, D) bf16
    b_stack = jnp.concatenate([pad_b(b) for (_, b) in stacked], 0)  # (L, D)    f32
    b0 = jnp.concatenate([pad_b(csi_b0), pad_b(skel_b0)], axis=0)   # (2, D)    f32

    return {
        "csi_w0": pad_w(csi_w0),
        "skel_w0": pad_w(skel_w0),
        "b0": b0,
        "w_stack": w_stack,
        "b_stack": b_stack,
        "n_mid": n_mid,
        "mid_relu_flags": mid_relu_flags,
        "embed_dim": embed_dim,
        "d_csi": int(csi_w0.shape[0]),
        "d_skel": int(skel_w0.shape[0]),
        "d_csi_pad": _round_up(int(csi_w0.shape[0]), 128),
        "d_skel_pad": _round_up(int(skel_w0.shape[0]), 128),
        "d_pad": int(d_pad),
        "logit_scale": params["logit_scale"],
    }


# ------------------------------- CLIP forward --------------------------------

def clip_forward(prepared, csis, skeletons):
    csi_x = jnp.concatenate(csis, axis=0)        # torch.cat(csis)
    skel_x = jnp.concatenate(skeletons, axis=0)  # torch.cat(skeletons)

    r_csi, r_skel = csi_x.shape[0], skel_x.shape[0]
    r_pad = _round_up(max(r_csi, r_skel), 8)

    # Lane-dense, bf16 activations (weights were prepared at init time).
    csi_in = (jnp.zeros((r_pad, prepared["d_csi_pad"]), jnp.bfloat16)
              .at[:r_csi, :prepared["d_csi"]].set(csi_x.astype(jnp.bfloat16)))
    skel_in = (jnp.zeros((r_pad, prepared["d_skel_pad"]), jnp.bfloat16)
               .at[:r_skel, :prepared["d_skel"]].set(skel_x.astype(jnp.bfloat16)))

    kernel = _make_clip_kernel(prepared["n_mid"], prepared["mid_relu_flags"], r_pad)
    vmem = pl.BlockSpec(memory_space=pltpu.MemorySpace.VMEM)

    out = pl.pallas_call(
        kernel,
        in_specs=[vmem] * 7,
        out_specs=vmem,
        out_shape=jax.ShapeDtypeStruct((2 * r_pad, prepared["d_pad"]), jnp.float32),
    )(csi_in, skel_in, prepared["csi_w0"], prepared["skel_w0"],
      prepared["b0"], prepared["w_stack"], prepared["b_stack"])

    e = prepared["embed_dim"]
    return {
        "csi_embed": out[:r_csi, :e],
        "skeleton_embed": out[r_pad:r_pad + r_skel, :e],
        "logit_scale": jnp.exp(prepared["logit_scale"]),
    }


# --------------------------- parameter construction --------------------------

def init_linear(key, in_dim, out_dim):
    """PyTorch nn.Linear default init (U(-1/sqrt(in), 1/sqrt(in))), (in, out) layout."""
    kw, kb = jax.random.split(key)
    bound = 1.0 / np.sqrt(in_dim)
    w = jax.random.uniform(kw, (in_dim, out_dim), jnp.float32, -bound, bound)
    b = jax.random.uniform(kb, (1, out_dim), jnp.float32, -bound, bound)
    return w, b


def init_mlp(key, input_dim, hidden_dim, output_dim, num_layers):
    layers = []
    d = input_dim
    for _ in range(num_layers):
        key, sub = jax.random.split(key)
        layers.append(init_linear(sub, d, hidden_dim))
        d = hidden_dim
    key, sub = jax.random.split(key)
    layers.append(init_linear(sub, hidden_dim, output_dim))
    return layers


def init_clip_params(key, embed_dim, mlp_hidden_dim, mlp_layers):
    keys = jax.random.split(key, 6)
    return {
        "mlp_csi": init_mlp(keys[0], 900, mlp_hidden_dim, embed_dim, mlp_layers),
        "mlp_skeleton": init_mlp(keys[1], 60, mlp_hidden_dim, embed_dim, mlp_layers),
        "shared_mlp": [
            init_linear(jax.random.fold_in(keys[2], 0), embed_dim, mlp_hidden_dim),
            init_linear(jax.random.fold_in(keys[2], 1), mlp_hidden_dim, embed_dim),
        ],
        "csi_projection": init_linear(keys[3], embed_dim, embed_dim),
        "skel_projection": init_linear(keys[4], embed_dim, embed_dim),
        "logit_scale": jnp.asarray(np.log(1.0 / 0.07), jnp.float32),
    }


# ----------------------------- pure-JAX reference -----------------------------

def _ref_chain(x, layers, flags):
    h = x
    for (w, b), f in zip(layers, flags):
        h = h @ w + b
        if f:
            h = jnp.maximum(h, 0.0)
    return h


def _ref_forward(params, csis, skeletons, step=1):
    def encode(x, mlp_params, proj_params):
        layers = list(mlp_params)
        flags = [True] * (len(mlp_params) - 1) + [False]
        layers += list(params["shared_mlp"])
        flags += [True, False]
        if step == 1 or step == 2:
            layers.append(proj_params)
            flags.append(False)
        return _ref_chain(x, layers, flags)

    return {
        "csi_embed": encode(jnp.concatenate(csis, 0),
                            params["mlp_csi"], params["csi_projection"]),
        "skeleton_embed": encode(jnp.concatenate(skeletons, 0),
                                 params["mlp_skeleton"], params["skel_projection"]),
        "logit_scale": jnp.exp(params["logit_scale"]),
    }


# ----------------------------------- main -------------------------------------

if __name__ == "__main__":
    embed_dim = 32
    mlp_hidden_dim = 64
    mlp_layers = 2
    step = 1
    batch_per_clip = 2
    n_clips = 2

    key = jax.random.PRNGKey(0)
    key, pkey, dkey = jax.random.split(key, 3)
    params = init_clip_params(pkey, embed_dim, mlp_hidden_dim, mlp_layers)
    prepared = prepare_clip_params(params, step)   # one-time, init-time preprocessing

    dkeys = jax.random.split(dkey, 2 * n_clips)
    # csis: list of (B, 900) feature tensors; skeletons: list of (B, 60) tensors.
    csis = [jax.random.normal(dkeys[i], (batch_per_clip, 900), jnp.float32)
            for i in range(n_clips)]
    skeletons = [jax.random.normal(dkeys[n_clips + i], (batch_per_clip, 60), jnp.float32)
                 for i in range(n_clips)]

    out = clip_forward(prepared, csis, skeletons)
    out = jax.block_until_ready(out)

    ref = _ref_forward(params, csis, skeletons, step=step)
    # bf16 MXU operands with f32 accumulation (+ offline f32 weight fusion):
    # a couple percent tolerance.
    np.testing.assert_allclose(np.asarray(out["csi_embed"]),
                               np.asarray(ref["csi_embed"]), rtol=2e-2, atol=2e-2)
    np.testing.assert_allclose(np.asarray(out["skeleton_embed"]),
                               np.asarray(ref["skeleton_embed"]), rtol=2e-2, atol=2e-2)
    np.testing.assert_allclose(np.asarray(out["logit_scale"]),
                               np.asarray(ref["logit_scale"]), rtol=1e-5)

    assert out["csi_embed"].shape == (batch_per_clip * n_clips, embed_dim)
    assert out["skeleton_embed"].shape == (batch_per_clip * n_clips, embed_dim)
    print("KERNEL_OK")
</pallas_src>

<mosaic_0001>
module attributes {stable_mosaic.version = 11 : i64} {
  func.func @kernel(%arg0: memref<8x1024xbf16, #tpu.memory_space<vmem>>, %arg1: memref<8x128xbf16, #tpu.memory_space<vmem>>, %arg2: memref<1024x128xbf16, #tpu.memory_space<vmem>>, %arg3: memref<128x128xbf16, #tpu.memory_space<vmem>>, %arg4: memref<2x128xf32, #tpu.memory_space<vmem>>, %arg5: memref<7x128x128xbf16, #tpu.memory_space<vmem>>, %arg6: memref<7x128xf32, #tpu.memory_space<vmem>>, %arg7: memref<16x128xf32, #tpu.memory_space<vmem>>) attributes {dimension_semantics = [], scalar_prefetch = 0 : i64, scratch_operands = 0 : i64, tpu.core_type = #tpu.core_type<tc>} {
    %c0 = arith.constant 0 : index
    %c0_0 = arith.constant 0 : index
    %0 = vector.load %arg0[%c0, %c0_0] : memref<8x1024xbf16, #tpu.memory_space<vmem>>, vector<8x1024xbf16>
    %c0_1 = arith.constant 0 : index
    %c0_2 = arith.constant 0 : index
    %1 = vector.load %arg2[%c0_1, %c0_2] : memref<1024x128xbf16, #tpu.memory_space<vmem>>, vector<1024x128xbf16>
    %c0_3 = arith.constant 0 : index
    %c0_4 = arith.constant 0 : index
    %2 = vector.load %arg4[%c0_3, %c0_4] : memref<2x128xf32, #tpu.memory_space<vmem>>, vector<1x128xf32>
    %cst = arith.constant dense<0.000000e+00> : vector<8x128xf32>
    %3 = tpu.matmul %0, %1, %cst {dimension_numbers = #tpu.dot_dimension_numbers<[1], [0], [0], [1], [0, 0, 1, 1], [], []>} : vector<8x1024xbf16>, vector<1024x128xbf16>, vector<8x128xf32> -> vector<8x128xf32>
    %4 = vector.broadcast %2 : vector<1x128xf32> to vector<8x128xf32>
    %5 = arith.addf %3, %4 : vector<8x128xf32>
    %cst_5 = arith.constant 0.000000e+00 : f32
    %6 = vector.broadcast %cst_5 : f32 to vector<8x128xf32>
    %7 = arith.maximumf %5, %6 : vector<8x128xf32>
    %c0_6 = arith.constant 0 : index
    %c0_7 = arith.constant 0 : index
    %8 = vector.load %arg1[%c0_6, %c0_7] : memref<8x128xbf16, #tpu.memory_space<vmem>>, vector<8x128xbf16>
    %c0_8 = arith.constant 0 : index
    %c0_9 = arith.constant 0 : index
    %9 = vector.load %arg3[%c0_8, %c0_9] : memref<128x128xbf16, #tpu.memory_space<vmem>>, vector<128x128xbf16>
    %c1 = arith.constant 1 : index
    %c0_10 = arith.constant 0 : index
    %10 = vector.load %arg4[%c1, %c0_10] : memref<2x128xf32, #tpu.memory_space<vmem>>, vector<1x128xf32>
    %cst_11 = arith.constant dense<0.000000e+00> : vector<8x128xf32>
    %11 = tpu.matmul %8, %9, %cst_11 {dimension_numbers = #tpu.dot_dimension_numbers<[1], [0], [0], [1], [0, 0, 1, 1], [], []>} : vector<8x128xbf16>, vector<128x128xbf16>, vector<8x128xf32> -> vector<8x128xf32>
    %12 = vector.broadcast %10 : vector<1x128xf32> to vector<8x128xf32>
    %13 = arith.addf %11, %12 : vector<8x128xf32>
    %cst_12 = arith.constant 0.000000e+00 : f32
    %14 = vector.broadcast %cst_12 : f32 to vector<8x128xf32>
    %15 = arith.maximumf %13, %14 : vector<8x128xf32>
    %c0_13 = arith.constant 0 : index
    %c0_14 = arith.constant 0 : index
    %c0_15 = arith.constant 0 : index
    %16 = vector.load %arg5[%c0_13, %c0_14, %c0_15] : memref<7x128x128xbf16, #tpu.memory_space<vmem>>, vector<1x128x128xbf16>
    %17 = vector.shape_cast %16 : vector<1x128x128xbf16> to vector<128x128xbf16>
    %c0_16 = arith.constant 0 : index
    %c0_17 = arith.constant 0 : index
    %18 = vector.load %arg6[%c0_16, %c0_17] : memref<7x128xf32, #tpu.memory_space<vmem>>, vector<1x128xf32>
    %19 = arith.truncf %7 : vector<8x128xf32> to vector<8x128xbf16>
    %cst_18 = arith.constant dense<0.000000e+00> : vector<8x128xf32>
    %20 = tpu.matmul %19, %17, %cst_18 {dimension_numbers = #tpu.dot_dimension_numbers<[1], [0], [0], [1], [0, 0, 1, 1], [], []>} : vector<8x128xbf16>, vector<128x128xbf16>, vector<8x128xf32> -> vector<8x128xf32>
    %21 = vector.broadcast %18 : vector<1x128xf32> to vector<8x128xf32>
    %22 = arith.addf %20, %21 : vector<8x128xf32>
    %cst_19 = arith.constant 0.000000e+00 : f32
    %23 = vector.broadcast %cst_19 : f32 to vector<8x128xf32>
    %24 = arith.maximumf %22, %23 : vector<8x128xf32>
    %c1_20 = arith.constant 1 : index
    %c0_21 = arith.constant 0 : index
    %c0_22 = arith.constant 0 : index
    %25 = vector.load %arg5[%c1_20, %c0_21, %c0_22] : memref<7x128x128xbf16, #tpu.memory_space<vmem>>, vector<1x128x128xbf16>
    %26 = vector.shape_cast %25 : vector<1x128x128xbf16> to vector<128x128xbf16>
    %c1_23 = arith.constant 1 : index
    %c0_24 = arith.constant 0 : index
    %27 = vector.load %arg6[%c1_23, %c0_24] : memref<7x128xf32, #tpu.memory_space<vmem>>, vector<1x128xf32>
    %28 = arith.truncf %24 : vector<8x128xf32> to vector<8x128xbf16>
    %cst_25 = arith.constant dense<0.000000e+00> : vector<8x128xf32>
    %29 = tpu.matmul %28, %26, %cst_25 {dimension_numbers = #tpu.dot_dimension_numbers<[1], [0], [0], [1], [0, 0, 1, 1], [], []>} : vector<8x128xbf16>, vector<128x128xbf16>, vector<8x128xf32> -> vector<8x128xf32>
    %30 = vector.broadcast %27 : vector<1x128xf32> to vector<8x128xf32>
    %31 = arith.addf %29, %30 : vector<8x128xf32>
    %c2 = arith.constant 2 : index
    %c0_26 = arith.constant 0 : index
    %c0_27 = arith.constant 0 : index
    %32 = vector.load %arg5[%c2, %c0_26, %c0_27] : memref<7x128x128xbf16, #tpu.memory_space<vmem>>, vector<1x128x128xbf16>
    %33 = vector.shape_cast %32 : vector<1x128x128xbf16> to vector<128x128xbf16>
    %c2_28 = arith.constant 2 : index
    %c0_29 = arith.constant 0 : index
    %34 = vector.load %arg6[%c2_28, %c0_29] : memref<7x128xf32, #tpu.memory_space<vmem>>, vector<1x128xf32>
    %35 = arith.truncf %15 : vector<8x128xf32> to vector<8x128xbf16>
    %cst_30 = arith.constant dense<0.000000e+00> : vector<8x128xf32>
    %36 = tpu.matmul %35, %33, %cst_30 {dimension_numbers = #tpu.dot_dimension_numbers<[1], [0], [0], [1], [0, 0, 1, 1], [], []>} : vector<8x128xbf16>, vector<128x128xbf16>, vector<8x128xf32> -> vector<8x128xf32>
    %37 = vector.broadcast %34 : vector<1x128xf32> to vector<8x128xf32>
    %38 = arith.addf %36, %37 : vector<8x128xf32>
    %cst_31 = arith.constant 0.000000e+00 : f32
    %39 = vector.broadcast %cst_31 : f32 to vector<8x128xf32>
    %40 = arith.maximumf %38, %39 : vector<8x128xf32>
    %c3 = arith.constant 3 : index
    %c0_32 = arith.constant 0 : index
    %c0_33 = arith.constant 0 : index
    %41 = vector.load %arg5[%c3, %c0_32, %c0_33] : memref<7x128x128xbf16, #tpu.memory_space<vmem>>, vector<1x128x128xbf16>
    %42 = vector.shape_cast %41 : vector<1x128x128xbf16> to vector<128x128xbf16>
    %c3_34 = arith.constant 3 : index
    %c0_35 = arith.constant 0 : index
    %43 = vector.load %arg6[%c3_34, %c0_35] : memref<7x128xf32, #tpu.memory_space<vmem>>, vector<1x128xf32>
    %44 = arith.truncf %40 : vector<8x128xf32> to vector<8x128xbf16>
    %cst_36 = arith.constant dense<0.000000e+00> : vector<8x128xf32>
    %45 = tpu.matmul %44, %42, %cst_36 {dimension_numbers = #tpu.dot_dimension_numbers<[1], [0], [0], [1], [0, 0, 1, 1], [], []>} : vector<8x128xbf16>, vector<128x128xbf16>, vector<8x128xf32> -> vector<8x128xf32>
    %46 = vector.broadcast %43 : vector<1x128xf32> to vector<8x128xf32>
    %47 = arith.addf %45, %46 : vector<8x128xf32>
    %48 = tpu.concatenate %31, %47 in 0 : vector<8x128xf32>, vector<8x128xf32> -> vector<16x128xf32>
    %c4 = arith.constant 4 : index
    %c0_37 = arith.constant 0 : index
    %c0_38 = arith.constant 0 : index
    %49 = vector.load %arg5[%c4, %c0_37, %c0_38] : memref<7x128x128xbf16, #tpu.memory_space<vmem>>, vector<1x128x128xbf16>
    %50 = vector.shape_cast %49 : vector<1x128x128xbf16> to vector<128x128xbf16>
    %c4_39 = arith.constant 4 : index
    %c0_40 = arith.constant 0 : index
    %51 = vector.load %arg6[%c4_39, %c0_40] : memref<7x128xf32, #tpu.memory_space<vmem>>, vector<1x128xf32>
    %52 = arith.truncf %48 : vector<16x128xf32> to vector<16x128xbf16>
    %cst_41 = arith.constant dense<0.000000e+00> : vector<16x128xf32>
    %53 = tpu.matmul %52, %50, %cst_41 {dimension_numbers = #tpu.dot_dimension_numbers<[1], [0], [0], [1], [0, 0, 1, 1], [], []>} : vector<16x128xbf16>, vector<128x128xbf16>, vector<16x128xf32> -> vector<16x128xf32>
    %54 = vector.broadcast %51 : vector<1x128xf32> to vector<16x128xf32>
    %55 = arith.addf %53, %54 : vector<16x128xf32>
    %cst_42 = arith.constant 0.000000e+00 : f32
    %56 = vector.broadcast %cst_42 : f32 to vector<16x128xf32>
    %57 = arith.maximumf %55, %56 : vector<16x128xf32>
    %58 = vector.extract_strided_slice %57 {offsets = [0, 0], sizes = [8, 128], strides = [1, 1]} : vector<16x128xf32> to vector<8x128xf32>
    %c5 = arith.constant 5 : index
    %c0_43 = arith.constant 0 : index
    %c0_44 = arith.constant 0 : index
    %59 = vector.load %arg5[%c5, %c0_43, %c0_44] : memref<7x128x128xbf16, #tpu.memory_space<vmem>>, vector<1x128x128xbf16>
    %60 = vector.shape_cast %59 : vector<1x128x128xbf16> to vector<128x128xbf16>
    %c5_45 = arith.constant 5 : index
    %c0_46 = arith.constant 0 : index
    %61 = vector.load %arg6[%c5_45, %c0_46] : memref<7x128xf32, #tpu.memory_space<vmem>>, vector<1x128xf32>
    %62 = arith.truncf %58 : vector<8x128xf32> to vector<8x128xbf16>
    %cst_47 = arith.constant dense<0.000000e+00> : vector<8x128xf32>
    %63 = tpu.matmul %62, %60, %cst_47 {dimension_numbers = #tpu.dot_dimension_numbers<[1], [0], [0], [1], [0, 0, 1, 1], [], []>} : vector<8x128xbf16>, vector<128x128xbf16>, vector<8x128xf32> -> vector<8x128xf32>
    %64 = vector.broadcast %61 : vector<1x128xf32> to vector<8x128xf32>
    %65 = arith.addf %63, %64 : vector<8x128xf32>
    %66 = vector.extract_strided_slice %57 {offsets = [8, 0], sizes = [8, 128], strides = [1, 1]} : vector<16x128xf32> to vector<8x128xf32>
    %c6 = arith.constant 6 : index
    %c0_48 = arith.constant 0 : index
    %c0_49 = arith.constant 0 : index
    %67 = vector.load %arg5[%c6, %c0_48, %c0_49] : memref<7x128x128xbf16, #tpu.memory_space<vmem>>, vector<1x128x128xbf16>
    %68 = vector.shape_cast %67 : vector<1x128x128xbf16> to vector<128x128xbf16>
    %c6_50 = arith.constant 6 : index
    %c0_51 = arith.constant 0 : index
    %69 = vector.load %arg6[%c6_50, %c0_51] : memref<7x128xf32, #tpu.memory_space<vmem>>, vector<1x128xf32>
    %70 = arith.truncf %66 : vector<8x128xf32> to vector<8x128xbf16>
    %cst_52 = arith.constant dense<0.000000e+00> : vector<8x128xf32>
    %71 = tpu.matmul %70, %68, %cst_52 {dimension_numbers = #tpu.dot_dimension_numbers<[1], [0], [0], [1], [0, 0, 1, 1], [], []>} : vector<8x128xbf16>, vector<128x128xbf16>, vector<8x128xf32> -> vector<8x128xf32>
    %72 = vector.broadcast %69 : vector<1x128xf32> to vector<8x128xf32>
    %73 = arith.addf %71, %72 : vector<8x128xf32>
    %c0_53 = arith.constant 0 : index
    %c0_54 = arith.constant 0 : index
    %74 = vector.load %arg7[%c0_53, %c0_54] : memref<16x128xf32, #tpu.memory_space<vmem>>, vector<8x128xf32>
    tpu.vector_store %arg7[%c0_53, %c0_54], %65 {strides = array<i32>} : memref<16x128xf32, #tpu.memory_space<vmem>>, vector<8x128xf32>,
    %c8 = arith.constant 8 : index
    %c0_55 = arith.constant 0 : index
    %75 = vector.load %arg7[%c8, %c0_55] : memref<16x128xf32, #tpu.memory_space<vmem>>, vector<8x128xf32>
    tpu.vector_store %arg7[%c8, %c0_55], %73 {strides = array<i32>} : memref<16x128xf32, #tpu.memory_space<vmem>>, vector<8x128xf32>,
    return
  }
}

</mosaic_0001>

<llo_original>
// kernel: tpu_custom_call.1
$region0: #{tpu_custom_call.1}
  #allocation0 [shape = 'u32[]', space=smem, size = 0x4, offset = 0x4, fixed_abs, tag = 'smem constant byte address 0x4 - core index']
  #allocation1 [shape = 'u32[144,128]{1,0:T(1,128)}', space=vmem, size = 0x12000, scoped, tag = 'internal scratch']
  %s0 = inlined_call_operand.hbm [shape: bf16[8,1024], index: 0, kind: input, shape index: {}]
  %s1 = inlined_call_operand.hbm [shape: bf16[8,128], index: 1, kind: input, shape index: {}]
  %s2 = inlined_call_operand.hbm [shape: bf16[1024,128], index: 2, kind: input, shape index: {}]
  %s3 = inlined_call_operand.hbm [shape: bf16[128,128], index: 3, kind: input, shape index: {}]
  %s4 = inlined_call_operand.vmem [shape: f32[2,128], index: 4, kind: input, shape index: {}]
  %s5 = inlined_call_operand.hbm [shape: bf16[7,128,128], index: 5, kind: input, shape index: {}]
  %s6 = inlined_call_operand.vmem [shape: f32[7,128], index: 6, kind: input, shape index: {}]
  %s7 = inlined_call_operand.hbm [shape: f32[16,128], index: 7, kind: output, shape index: {}]
  %s8 = sld [smem:[#allocation0]]
  $region58: #{tpu_custom_call.1} parent=0
    _
  %s10 = ssub.s32 1, %s8
  %s11 = scalar_select 0, %s10, %s8
  $region1: #{tpu_custom_call.1} parent=0
    #allocation2 [shape = 'u8[16384]{0}', space=vmem, size = 0x4000, scoped, tag = 'input window, operand 0, single buffered']
    #allocation3 [shape = 's32[1]{0}', space=sflag, size = 0x4, scoped, tag = 'scoped memory for tpu_custom_call.1']
    #allocation4 [shape = 's32[1]{0}', space=sflag, size = 0x4, scoped, tag = 'scoped memory for tpu_custom_call.1']
    #allocation5 [shape = 'u8[2048]{0}', space=vmem, size = 0x800, scoped, tag = 'input window, operand 1, single buffered']
    #allocation6 [shape = 's32[1]{0}', space=sflag, size = 0x4, scoped, tag = 'scoped memory for tpu_custom_call.1']
    #allocation7 [shape = 'u8[262144]{0}', space=vmem, size = 0x40000, scoped, tag = 'input window, operand 2, single buffered']
    #allocation8 [shape = 'u8[32768]{0}', space=vmem, size = 0x8000, scoped, tag = 'input window, operand 3, single buffered']
    #allocation9 [shape = 's32[1]{0}', space=sflag, size = 0x4, scoped, tag = 'scoped memory for tpu_custom_call.1']
    #allocation10 [shape = 'u8[229376]{0}', space=vmem, size = 0x38000, scoped, tag = 'input window, operand 5, single buffered']
    #allocation11 [shape = 'u8[8192]{0}', space=vmem, size = 0x2000, scoped, tag = 'output window, operand 0, single buffered']
    %12 = vsyncpa [#allocation3], 0
    %13 = vsyncpa [#allocation6], 0
    %14 = vsyncpa [#allocation9], 0
    %15 = vsyncpa [#allocation4], 0
    // Predicated region
    $region2: #{tpu_custom_call.1} parent=1 // pred_check
      _
    $region3: #{tpu_custom_call.1} parent=1 // pred_check_branch
      %17 = sbr.rel (0) target = $region5
    $region4: #{tpu_custom_call.1} parent=1 // pred_region
      %s19 = ssub.s32 512, 512
      %20 = vsyncadd [#allocation3], %s19
      %s22 = sshll.u32 [#allocation2], 4
      %s23 = int_to_ptr.vmem [resolvable:$true] %s22
      %25 = dma.hbm_to_vmem [thread:$0]  %s0, 512, %s23, [#allocation3]
    $region5: #{tpu_custom_call.1} parent=1 // pred_fallthru
      _
    // Predicated region
    $region6: #{tpu_custom_call.1} parent=1 // pred_check
      _
    $region7: #{tpu_custom_call.1} parent=1 // pred_check_branch
      %27 = sbr.rel (0) target = $region9
    $region8: #{tpu_custom_call.1} parent=1 // pred_region
      %s29 = ssub.s32 64, 64
      %30 = vsyncadd [#allocation6], %s29
      %s32 = sshll.u32 [#allocation5], 4
      %s33 = int_to_ptr.vmem [resolvable:$true] %s32
      %35 = dma.hbm_to_vmem [thread:$0]  %s1, 64, %s33, [#allocation6]
    $region9: #{tpu_custom_call.1} parent=1 // pred_fallthru
      _
    // Predicated region
    $region10: #{tpu_custom_call.1} parent=1 // pred_check
      _
    $region11: #{tpu_custom_call.1} parent=1 // pred_check_branch
      %37 = sbr.rel (0) target = $region13
    $region12: #{tpu_custom_call.1} parent=1 // pred_region
      %s39 = ssub.s32 8192, 8192
      %40 = vsyncadd [#allocation6], %s39
      %s41 = sshll.u32 [#allocation7], 4
      %s42 = int_to_ptr.vmem [resolvable:$true] %s41
      %47 = dma.hbm_to_vmem [thread:$0]  %s2, 8192, %s42, [#allocation6], 64, 64, 4
    $region13: #{tpu_custom_call.1} parent=1 // pred_fallthru
      _
    // Predicated region
    $region14: #{tpu_custom_call.1} parent=1 // pred_check
      _
    $region15: #{tpu_custom_call.1} parent=1 // pred_check_branch
      %49 = sbr.rel (0) target = $region17
    $region16: #{tpu_custom_call.1} parent=1 // pred_region
      %s51 = ssub.s32 1024, 1024
      %52 = vsyncadd [#allocation9], %s51
      %s53 = sshll.u32 [#allocation8], 4
      %s54 = int_to_ptr.vmem [resolvable:$true] %s53
      %59 = dma.hbm_to_vmem [thread:$0]  %s3, 1024, %s54, [#allocation9], 64, 64, 4
    $region17: #{tpu_custom_call.1} parent=1 // pred_fallthru
      _
    // Predicated region
    $region18: #{tpu_custom_call.1} parent=1 // pred_check
      _
    $region19: #{tpu_custom_call.1} parent=1 // pred_check_branch
      %61 = sbr.rel (0) target = $region21
    $region20: #{tpu_custom_call.1} parent=1 // pred_region
      _
    $region21: #{tpu_custom_call.1} parent=1 // pred_fallthru
      _
    // Predicated region
    $region22: #{tpu_custom_call.1} parent=1 // pred_check
      _
    $region23: #{tpu_custom_call.1} parent=1 // pred_check_branch
      %63 = sbr.rel (0) target = $region25
    $region24: #{tpu_custom_call.1} parent=1 // pred_region
      %s65 = ssub.s32 7168, 7168
      %66 = vsyncadd [#allocation9], %s65
      %s67 = sshll.u32 [#allocation10], 4
      %s68 = int_to_ptr.vmem [resolvable:$true] %s67
      %73 = dma.hbm_to_vmem [thread:$0]  %s5, 7168, %s68, [#allocation9], 64, 64, 4
    $region25: #{tpu_custom_call.1} parent=1 // pred_fallthru
      _
    // Predicated region
    $region26: #{tpu_custom_call.1} parent=1 // pred_check
      _
    $region27: #{tpu_custom_call.1} parent=1 // pred_check_branch
      %75 = sbr.rel (0) target = $region29
    $region28: #{tpu_custom_call.1} parent=1 // pred_region
      _
    $region29: #{tpu_custom_call.1} parent=1 // pred_fallthru
      _
    // Predicated region
    $region30: #{tpu_custom_call.1} parent=1 // pred_check
      _
    $region31: #{tpu_custom_call.1} parent=1 // pred_check_branch
      %77 = sbr.rel (0) target = $region33
    $region32: #{tpu_custom_call.1} parent=1 // pred_region
      %78 = dma.done [#allocation3], 512
    $region33: #{tpu_custom_call.1} parent=1 // pred_fallthru
      _
    // Predicated region
    $region34: #{tpu_custom_call.1} parent=1 // pred_check
      _
    $region35: #{tpu_custom_call.1} parent=1 // pred_check_branch
      %80 = sbr.rel (0) target = $region37
    $region36: #{tpu_custom_call.1} parent=1 // pred_region
      %81 = dma.done [#allocation6], 64
    $region37: #{tpu_custom_call.1} parent=1 // pred_fallthru
      _
    // Predicated region
    $region38: #{tpu_custom_call.1} parent=1 // pred_check
      _
    $region39: #{tpu_custom_call.1} parent=1 // pred_check_branch
      %83 = sbr.rel (0) target = $region41
    $region40: #{tpu_custom_call.1} parent=1 // pred_region
      %84 = dma.done [#allocation6], 8192
    $region41: #{tpu_custom_call.1} parent=1 // pred_fallthru
      _
    // Predicated region
    $region42: #{tpu_custom_call.1} parent=1 // pred_check
      _
    $region43: #{tpu_custom_call.1} parent=1 // pred_check_branch
      %86 = sbr.rel (0) target = $region45
    $region44: #{tpu_custom_call.1} parent=1 // pred_region
      %87 = dma.done [#allocation9], 1024
    $region45: #{tpu_custom_call.1} parent=1 // pred_fallthru
      _
    // Predicated region
    $region46: #{tpu_custom_call.1} parent=1 // pred_check
      _
    $region47: #{tpu_custom_call.1} parent=1 // pred_check_branch
      %89 = sbr.rel (0) target = $region49
    $region48: #{tpu_custom_call.1} parent=1 // pred_region
      %90 = dma.done [#allocation9], 7168
    $region49: #{tpu_custom_call.1} parent=1 // pred_fallthru
      _
    %v92 = vld [vmem:[#allocation2] sm:$0xff]
    %v93 = vld [vmem:[#allocation2 + $0x8] sm:$0xff]
    %v94 = vld [vmem:[#allocation2 + $0x10] sm:$0xff]
    %v95 = vld [vmem:[#allocation2 + $0x18] sm:$0xff]
    %v96 = vld [vmem:[#allocation7] sm:$0xf]
    %v97 = vld [vmem:[#allocation7 + $0x4] sm:$0xf]
    %v98 = vld [vmem:[#allocation7 + $0x8] sm:$0xf]
    %v99 = vld [vmem:[#allocation7 + $0xc] sm:$0xf]
    %v100 = vld [vmem:[#allocation7 + $0x10] sm:$0xf]
    %v101 = vld [vmem:[#allocation7 + $0x14] sm:$0xf]
    %v102 = vld [vmem:[#allocation7 + $0x18] sm:$0xf]
    %v103 = vld [vmem:[#allocation7 + $0x1c] sm:$0xf]
    %v104 = vld [vmem:[#allocation7 + $0x20] sm:$0xf]
    %v105 = vld [vmem:[#allocation7 + $0x24] sm:$0xf]
    %v106 = vld [vmem:[#allocation7 + $0x28] sm:$0xf]
    %v107 = vld [vmem:[#allocation7 + $0x2c] sm:$0xf]
    %v108 = vld [vmem:[#allocation7 + $0x30] sm:$0xf]
    %v109 = vld [vmem:[#allocation7 + $0x34] sm:$0xf]
    %v110 = vld [vmem:[#allocation7 + $0x38] sm:$0xf]
    %v111 = vld [vmem:[#allocation7 + $0x3c] sm:$0xf]
    %v112 = vld [vmem:[#allocation7 + $0x40] sm:$0xf]
    %v113 = vld [vmem:[#allocation7 + $0x44] sm:$0xf]
    %v114 = vld [vmem:[#allocation7 + $0x48] sm:$0xf]
    %v115 = vld [vmem:[#allocation7 + $0x4c] sm:$0xf]
    %v116 = vld [vmem:[#allocation7 + $0x50] sm:$0xf]
    %v117 = vld [vmem:[#allocation7 + $0x54] sm:$0xf]
    %v118 = vld [vmem:[#allocation7 + $0x58] sm:$0xf]
    %v119 = vld [vmem:[#allocation7 + $0x5c] sm:$0xf]
    %v120 = vld [vmem:[#allocation7 + $0x60] sm:$0xf]
    %v121 = vld [vmem:[#allocation7 + $0x64] sm:$0xf]
    %v122 = vld [vmem:[#allocation7 + $0x68] sm:$0xf]
    %v123 = vld [vmem:[#allocation7 + $0x6c] sm:$0xf]
    %v124 = vld [vmem:[#allocation7 + $0x70] sm:$0xf]
    %v125 = vld [vmem:[#allocation7 + $0x74] sm:$0xf]
    %v126 = vld [vmem:[#allocation7 + $0x78] sm:$0xf]
    %v127 = vld [vmem:[#allocation7 + $0x7c] sm:$0xf]
    %v128 = vld [vmem:[#allocation7 + $0x80] sm:$0xf]
    %v129 = vld [vmem:[#allocation7 + $0x84] sm:$0xf]
    %v130 = vld [vmem:[#allocation7 + $0x88] sm:$0xf]
    %v131 = vld [vmem:[#allocation7 + $0x8c] sm:$0xf]
    %v132 = vld [vmem:[#allocation7 + $0x90] sm:$0xf]
    %v133 = vld [vmem:[#allocation7 + $0x94] sm:$0xf]
    %v134 = vld [vmem:[#allocation7 + $0x98] sm:$0xf]
    %v135 = vld [vmem:[#allocation7 + $0x9c] sm:$0xf]
    %v136 = vld [vmem:[#allocation7 + $0xa0] sm:$0xf]
    %v137 = vld [vmem:[#allocation7 + $0xa4] sm:$0xf]
    %v138 = vld [vmem:[#allocation7 + $0xa8] sm:$0xf]
    %v139 = vld [vmem:[#allocation7 + $0xac] sm:$0xf]
    %v140 = vld [vmem:[#allocation7 + $0xb0] sm:$0xf]
    %v141 = vld [vmem:[#allocation7 + $0xb4] sm:$0xf]
    %v142 = vld [vmem:[#allocation7 + $0xb8] sm:$0xf]
    %v143 = vld [vmem:[#allocation7 + $0xbc] sm:$0xf]
    %v144 = vld [vmem:[#allocation7 + $0xc0] sm:$0xf]
    %v145 = vld [vmem:[#allocation7 + $0xc4] sm:$0xf]
    %v146 = vld [vmem:[#allocation7 + $0xc8] sm:$0xf]
    %v147 = vld [vmem:[#allocation7 + $0xcc] sm:$0xf]
    %v148 = vld [vmem:[#allocation7 + $0xd0] sm:$0xf]
    %v149 = vld [vmem:[#allocation7 + $0xd4] sm:$0xf]
    %v150 = vld [vmem:[#allocation7 + $0xd8] sm:$0xf]
    %v151 = vld [vmem:[#allocation7 + $0xdc] sm:$0xf]
    %v152 = vld [vmem:[#allocation7 + $0xe0] sm:$0xf]
    %v153 = vld [vmem:[#allocation7 + $0xe4] sm:$0xf]
    %v154 = vld [vmem:[#allocation7 + $0xe8] sm:$0xf]
    %v155 = vld [vmem:[#allocation7 + $0xec] sm:$0xf]
    %v156 = vld [vmem:[#allocation7 + $0xf0] sm:$0xf]
    %v157 = vld [vmem:[#allocation7 + $0xf4] sm:$0xf]
    %v158 = vld [vmem:[#allocation7 + $0xf8] sm:$0xf]
    %v159 = vld [vmem:[#allocation7 + $0xfc] sm:$0xf]
    %v160 = vld [vmem:[#allocation7 + $0x100] sm:$0xf]
    %v161 = vld [vmem:[#allocation7 + $0x104] sm:$0xf]
    %v162 = vld [vmem:[#allocation7 + $0x108] sm:$0xf]
    %v163 = vld [vmem:[#allocation7 + $0x10c] sm:$0xf]
    %v164 = vld [vmem:[#allocation7 + $0x110] sm:$0xf]
    %v165 = vld [vmem:[#allocation7 + $0x114] sm:$0xf]
    %v166 = vld [vmem:[#allocation7 + $0x118] sm:$0xf]
    %v167 = vld [vmem:[#allocation7 + $0x11c] sm:$0xf]
    %v168 = vld [vmem:[#allocation7 + $0x120] sm:$0xf]
    %v169 = vld [vmem:[#allocation7 + $0x124] sm:$0xf]
    %v170 = vld [vmem:[#allocation7 + $0x128] sm:$0xf]
    %v171 = vld [vmem:[#allocation7 + $0x12c] sm:$0xf]
    %v172 = vld [vmem:[#allocation7 + $0x130] sm:$0xf]
    %v173 = vld [vmem:[#allocation7 + $0x134] sm:$0xf]
    %v174 = vld [vmem:[#allocation7 + $0x138] sm:$0xf]
    %v175 = vld [vmem:[#allocation7 + $0x13c] sm:$0xf]
    %v176 = vld [vmem:[#allocation7 + $0x140] sm:$0xf]
    %v177 = vld [vmem:[#allocation7 + $0x144] sm:$0xf]
    %v178 = vld [vmem:[#allocation7 + $0x148] sm:$0xf]
    %v179 = vld [vmem:[#allocation7 + $0x14c] sm:$0xf]
    %v180 = vld [vmem:[#allocation7 + $0x150] sm:$0xf]
    %v181 = vld [vmem:[#allocation7 + $0x154] sm:$0xf]
    %v182 = vld [vmem:[#allocation7 + $0x158] sm:$0xf]
    %v183 = vld [vmem:[#allocation7 + $0x15c] sm:$0xf]
    %v184 = vld [vmem:[#allocation7 + $0x160] sm:$0xf]
    %v185 = vld [vmem:[#allocation7 + $0x164] sm:$0xf]
    %v186 = vld [vmem:[#allocation7 + $0x168] sm:$0xf]
    %v187 = vld [vmem:[#allocation7 + $0x16c] sm:$0xf]
    %v188 = vld [vmem:[#allocation7 + $0x170] sm:$0xf]
    %v189 = vld [vmem:[#allocation7 + $0x174] sm:$0xf]
    %v190 = vld [vmem:[#allocation7 + $0x178] sm:$0xf]
    %v191 = vld [vmem:[#allocation7 + $0x17c] sm:$0xf]
    %v192 = vld [vmem:[#allocation7 + $0x180] sm:$0xf]
    %v193 = vld [vmem:[#allocation7 + $0x184] sm:$0xf]
    %v194 = vld [vmem:[#allocation7 + $0x188] sm:$0xf]
    %v195 = vld [vmem:[#allocation7 + $0x18c] sm:$0xf]
    %v196 = vld [vmem:[#allocation7 + $0x190] sm:$0xf]
    %v197 = vld [vmem:[#allocation7 + $0x194] sm:$0xf]
    %v198 = vld [vmem:[#allocation7 + $0x198] sm:$0xf]
    %v199 = vld [vmem:[#allocation7 + $0x19c] sm:$0xf]
    %v200 = vld [vmem:[#allocation7 + $0x1a0] sm:$0xf]
    %v201 = vld [vmem:[#allocation7 + $0x1a4] sm:$0xf]
    %v202 = vld [vmem:[#allocation7 + $0x1a8] sm:$0xf]
    %v203 = vld [vmem:[#allocation7 + $0x1ac] sm:$0xf]
    %v204 = vld [vmem:[#allocation7 + $0x1b0] sm:$0xf]
    %v205 = vld [vmem:[#allocation7 + $0x1b4] sm:$0xf]
    %v206 = vld [vmem:[#allocation7 + $0x1b8] sm:$0xf]
    %v207 = vld [vmem:[#allocation7 + $0x1bc] sm:$0xf]
    %v208 = vld [vmem:[#allocation7 + $0x1c0] sm:$0xf]
    %v209 = vld [vmem:[#allocation7 + $0x1c4] sm:$0xf]
    %v210 = vld [vmem:[#allocation7 + $0x1c8] sm:$0xf]
    %v211 = vld [vmem:[#allocation7 + $0x1cc] sm:$0xf]
    %v212 = vld [vmem:[#allocation7 + $0x1d0] sm:$0xf]
    %v213 = vld [vmem:[#allocation7 + $0x1d4] sm:$0xf]
    %v214 = vld [vmem:[#allocation7 + $0x1d8] sm:$0xf]
    %v215 = vld [vmem:[#allocation7 + $0x1dc] sm:$0xf]
    %v216 = vld [vmem:[#allocation7 + $0x1e0] sm:$0xf]
    %v217 = vld [vmem:[#allocation7 + $0x1e4] sm:$0xf]
    %v218 = vld [vmem:[#allocation7 + $0x1e8] sm:$0xf]
    %v219 = vld [vmem:[#allocation7 + $0x1ec] sm:$0xf]
    %v220 = vld [vmem:[#allocation7 + $0x1f0] sm:$0xf]
    %v221 = vld [vmem:[#allocation7 + $0x1f4] sm:$0xf]
    %v222 = vld [vmem:[#allocation7 + $0x1f8] sm:$0xf]
    %v223 = vld [vmem:[#allocation7 + $0x1fc] sm:$0xf]
    %v224 = vld [vmem:[%s4] sm:$0x1]
    %v225 = vlaneseq
    %v226 = vshrl.u32 %v225, 7
    %v227 = vsub.s32 0, %v226
    %v228 = vrot.slane %v224, %v227
    %v233 = vunpack.c.l.b16 %v92
    %v234 = vunpack.c.h.b16 %v92
    %v235 = vunpack.c.l.b16 %v93
    %v236 = vunpack.c.h.b16 %v93
    %v237 = vunpack.c.l.b16 %v94
    %v238 = vunpack.c.h.b16 %v94
    %v239 = vunpack.c.l.b16 %v95
    %v240 = vunpack.c.h.b16 %v95
    %v241 = vpack.c.b16 %v233, %v233
    %v242 = vpack.c.b16 %v234, %v234
    %v243 = vpack.c.b16 %v235, %v235
    %v244 = vpack.c.b16 %v236, %v236
    %v245 = vpack.c.b16 %v237, %v237
    %v246 = vpack.c.b16 %v238, %v238
    %v247 = vpack.c.b16 %v239, %v239
    %v248 = vpack.c.b16 %v240, %v240
    %v385 = vunpack.c.l.b16 %v96
    %v386 = vunpack.c.l.b16 %v97
    %v387 = vunpack.c.l.b16 %v98
    %v388 = vunpack.c.l.b16 %v99
    %v389 = vunpack.c.l.b16 %v100
    %v390 = vunpack.c.l.b16 %v101
    %v391 = vunpack.c.l.b16 %v102
    %v392 = vunpack.c.l.b16 %v103
    %v393 = vunpack.c.l.b16 %v104
    %v394 = vunpack.c.l.b16 %v105
    %v395 = vunpack.c.l.b16 %v106
    %v396 = vunpack.c.l.b16 %v107
    %v397 = vunpack.c.l.b16 %v108
    %v398 = vunpack.c.l.b16 %v109
    %v399 = vunpack.c.l.b16 %v110
    %v400 = vunpack.c.l.b16 %v111
    %v401 = vunpack.c.l.b16 %v112
    %v402 = vunpack.c.l.b16 %v113
    %v403 = vunpack.c.l.b16 %v114
    %v404 = vunpack.c.l.b16 %v115
    %v405 = vunpack.c.l.b16 %v116
    %v406 = vunpack.c.l.b16 %v117
    %v407 = vunpack.c.l.b16 %v118
    %v408 = vunpack.c.l.b16 %v119
    %v409 = vunpack.c.l.b16 %v120
    %v410 = vunpack.c.l.b16 %v121
    %v411 = vunpack.c.l.b16 %v122
    %v412 = vunpack.c.l.b16 %v123
    %v413 = vunpack.c.l.b16 %v124
    %v414 = vunpack.c.l.b16 %v125
    %v415 = vunpack.c.l.b16 %v126
    %v416 = vunpack.c.l.b16 %v127
    %v417 = vunpack.c.l.b16 %v128
    %v418 = vunpack.c.l.b16 %v129
    %v419 = vunpack.c.l.b16 %v130
    %v420 = vunpack.c.l.b16 %v131
    %v421 = vunpack.c.l.b16 %v132
    %v422 = vunpack.c.l.b16 %v133
    %v423 = vunpack.c.l.b16 %v134
    %v424 = vunpack.c.l.b16 %v135
    %v425 = vunpack.c.l.b16 %v136
    %v426 = vunpack.c.l.b16 %v137
    %v427 = vunpack.c.l.b16 %v138
    %v428 = vunpack.c.l.b16 %v139
    %v429 = vunpack.c.l.b16 %v140
    %v430 = vunpack.c.l.b16 %v141
    %v431 = vunpack.c.l.b16 %v142
    %v432 = vunpack.c.l.b16 %v143
    %v433 = vunpack.c.l.b16 %v144
    %v434 = vunpack.c.l.b16 %v145
    %v435 = vunpack.c.l.b16 %v146
    %v436 = vunpack.c.l.b16 %v147
    %v437 = vunpack.c.l.b16 %v148
    %v438 = vunpack.c.l.b16 %v149
    %v439 = vunpack.c.l.b16 %v150
    %v440 = vunpack.c.l.b16 %v151
    %v441 = vunpack.c.l.b16 %v152
    %v442 = vunpack.c.l.b16 %v153
    %v443 = vunpack.c.l.b16 %v154
    %v444 = vunpack.c.l.b16 %v155
    %v445 = vunpack.c.l.b16 %v156
    %v446 = vunpack.c.l.b16 %v157
    %v447 = vunpack.c.l.b16 %v158
    %v448 = vunpack.c.l.b16 %v159
    %v449 = vunpack.c.l.b16 %v160
    %v450 = vunpack.c.l.b16 %v161
    %v451 = vunpack.c.l.b16 %v162
    %v452 = vunpack.c.l.b16 %v163
    %v453 = vunpack.c.l.b16 %v164
    %v454 = vunpack.c.l.b16 %v165
    %v455 = vunpack.c.l.b16 %v166
    %v456 = vunpack.c.l.b16 %v167
    %v457 = vunpack.c.l.b16 %v168
    %v458 = vunpack.c.l.b16 %v169
    %v459 = vunpack.c.l.b16 %v170
    %v460 = vunpack.c.l.b16 %v171
    %v461 = vunpack.c.l.b16 %v172
    %v462 = vunpack.c.l.b16 %v173
    %v463 = vunpack.c.l.b16 %v174
    %v464 = vunpack.c.l.b16 %v175
    %v465 = vunpack.c.l.b16 %v176
    %v466 = vunpack.c.l.b16 %v177
    %v467 = vunpack.c.l.b16 %v178
    %v468 = vunpack.c.l.b16 %v179
    %v469 = vunpack.c.l.b16 %v180
    %v470 = vunpack.c.l.b16 %v181
    %v471 = vunpack.c.l.b16 %v182
    %v472 = vunpack.c.l.b16 %v183
    %v473 = vunpack.c.l.b16 %v184
    %v474 = vunpack.c.l.b16 %v185
    %v475 = vunpack.c.l.b16 %v186
    %v476 = vunpack.c.l.b16 %v187
    %v477 = vunpack.c.l.b16 %v188
    %v478 = vunpack.c.l.b16 %v189
    %v479 = vunpack.c.l.b16 %v190
    %v480 = vunpack.c.l.b16 %v191
    %v481 = vunpack.c.l.b16 %v192
    %v482 = vunpack.c.l.b16 %v193
    %v483 = vunpack.c.l.b16 %v194
    %v484 = vunpack.c.l.b16 %v195
    %v485 = vunpack.c.l.b16 %v196
    %v486 = vunpack.c.l.b16 %v197
    %v487 = vunpack.c.l.b16 %v198
    %v488 = vunpack.c.l.b16 %v199
    %v489 = vunpack.c.l.b16 %v200
    %v490 = vunpack.c.l.b16 %v201
    %v491 = vunpack.c.l.b16 %v202
    %v492 = vunpack.c.l.b16 %v203
    %v493 = vunpack.c.l.b16 %v204
    %v494 = vunpack.c.l.b16 %v205
    %v495 = vunpack.c.l.b16 %v206
    %v496 = vunpack.c.l.b16 %v207
    %v497 = vunpack.c.l.b16 %v208
    %v498 = vunpack.c.l.b16 %v209
    %v499 = vunpack.c.l.b16 %v210
    %v500 = vunpack.c.l.b16 %v211
    %v501 = vunpack.c.l.b16 %v212
    %v502 = vunpack.c.l.b16 %v213
    %v503 = vunpack.c.l.b16 %v214
    %v504 = vunpack.c.l.b16 %v215
    %v505 = vunpack.c.l.b16 %v216
    %v506 = vunpack.c.l.b16 %v217
    %v507 = vunpack.c.l.b16 %v218
    %v508 = vunpack.c.l.b16 %v219
    %v509 = vunpack.c.l.b16 %v220
    %v510 = vunpack.c.l.b16 %v221
    %v511 = vunpack.c.l.b16 %v222
    %v512 = vunpack.c.l.b16 %v223
    %v513 = vpack.c.b16 %v386, %v385
    %v514 = vpack.c.b16 %v388, %v387
    %v515 = vpack.c.b16 %v390, %v389
    %v516 = vpack.c.b16 %v392, %v391
    %v517 = vpack.c.b16 %v394, %v393
    %v518 = vpack.c.b16 %v396, %v395
    %v519 = vpack.c.b16 %v398, %v397
    %v520 = vpack.c.b16 %v400, %v399
    %v521 = vpack.c.b16 %v402, %v401
    %v522 = vpack.c.b16 %v404, %v403
    %v523 = vpack.c.b16 %v406, %v405
    %v524 = vpack.c.b16 %v408, %v407
    %v525 = vpack.c.b16 %v410, %v409
    %v526 = vpack.c.b16 %v412, %v411
    %v527 = vpack.c.b16 %v414, %v413
    %v528 = vpack.c.b16 %v416, %v415
    %v529 = vpack.c.b16 %v418, %v417
    %v530 = vpack.c.b16 %v420, %v419
    %v531 = vpack.c.b16 %v422, %v421
    %v532 = vpack.c.b16 %v424, %v423
    %v533 = vpack.c.b16 %v426, %v425
    %v534 = vpack.c.b16 %v428, %v427
    %v535 = vpack.c.b16 %v430, %v429
    %v536 = vpack.c.b16 %v432, %v431
    %v537 = vpack.c.b16 %v434, %v433
    %v538 = vpack.c.b16 %v436, %v435
    %v539 = vpack.c.b16 %v438, %v437
    %v540 = vpack.c.b16 %v440, %v439
    %v541 = vpack.c.b16 %v442, %v441
    %v542 = vpack.c.b16 %v444, %v443
    %v543 = vpack.c.b16 %v446, %v445
    %v544 = vpack.c.b16 %v448, %v447
    %v545 = vpack.c.b16 %v450, %v449
    %v546 = vpack.c.b16 %v452, %v451
    %v547 = vpack.c.b16 %v454, %v453
    %v548 = vpack.c.b16 %v456, %v455
    %v549 = vpack.c.b16 %v458, %v457
    %v550 = vpack.c.b16 %v460, %v459
    %v551 = vpack.c.b16 %v462, %v461
    %v552 = vpack.c.b16 %v464, %v463
    %v553 = vpack.c.b16 %v466, %v465
    %v554 = vpack.c.b16 %v468, %v467
    %v555 = vpack.c.b16 %v470, %v469
    %v556 = vpack.c.b16 %v472, %v471
    %v557 = vpack.c.b16 %v474, %v473
    %v558 = vpack.c.b16 %v476, %v475
    %v559 = vpack.c.b16 %v478, %v477
    %v560 = vpack.c.b16 %v480, %v479
    %v561 = vpack.c.b16 %v482, %v481
    %v562 = vpack.c.b16 %v484, %v483
    %v563 = vpack.c.b16 %v486, %v485
    %v564 = vpack.c.b16 %v488, %v487
    %v565 = vpack.c.b16 %v490, %v489
    %v566 = vpack.c.b16 %v492, %v491
    %v567 = vpack.c.b16 %v494, %v493
    %v568 = vpack.c.b16 %v496, %v495
    %v569 = vpack.c.b16 %v498, %v497
    %v570 = vpack.c.b16 %v500, %v499
    %v571 = vpack.c.b16 %v502, %v501
    %v572 = vpack.c.b16 %v504, %v503
    %v573 = vpack.c.b16 %v506, %v505
    %v574 = vpack.c.b16 %v508, %v507
    %v575 = vpack.c.b16 %v510, %v509
    %v576 = vpack.c.b16 %v512, %v511
    %641 = vmatprep.subr.bf16.mxu0 0
    %642 = vmatpush1.bf16.msra.mxu0 %v520
    %643 = vmatprep.subr.bf16.mxu0 0
    %644 = vmatpush1.bf16.msra.mxu0 %v519
    %645 = vmatprep.subr.bf16.mxu0 0
    %646 = vmatpush1.bf16.msra.mxu0 %v518
    %647 = vmatprep.subr.bf16.mxu0 0
    %648 = vmatpush1.bf16.msra.mxu0 %v517
    %649 = vmatprep.subr.bf16.mxu0 0
    %650 = vmatpush1.bf16.msra.mxu0 %v516
    %651 = vmatprep.subr.bf16.mxu0 0
    %652 = vmatpush1.bf16.msra.mxu0 %v515
    %653 = vmatprep.subr.bf16.mxu0 0
    %654 = vmatpush1.bf16.msra.mxu0 %v514
    %655 = vmatprep.subr.bf16.mxu0 0
    %656 = vmatpush1.bf16.msra.mxu0 %v513
    %657 = vmatprep.subr.bf16.mxu0 0
    %658 = vmatpush2.bf16.msra.mxu0 %v528
    %659 = vmatprep.subr.bf16.mxu0 0
    %660 = vmatpush2.bf16.msra.mxu0 %v527
    %661 = vmatprep.subr.bf16.mxu0 0
    %662 = vmatpush2.bf16.msra.mxu0 %v526
    %663 = vmatprep.subr.bf16.mxu0 0
    %664 = vmatpush2.bf16.msra.mxu0 %v525
    %665 = vmatprep.subr.bf16.mxu0 0
    %666 = vmatpush2.bf16.msra.mxu0 %v524
    %667 = vmatprep.subr.bf16.mxu0 0
    %668 = vmatpush2.bf16.msra.mxu0 %v523
    %669 = vmatprep.subr.bf16.mxu0 0
    %670 = vmatpush2.bf16.msra.mxu0 %v522
    %671 = vmatprep.subr.bf16.mxu0 0
    %672 = vmatpush2.bf16.msra.mxu0 %v521
    %673 = vmatprep.mubr.bf16.mxu0 %v242
    %674 = vmatmul.mubr.bf16.gmra.mxu0 %v241
    %v675 = vpop.f32.mrf.mxu0
    %v676 = vadd.f32 %v228, %v675
    %v677 = vpop.f32.mrf.mxu0
    %v678 = vpop.f32.mrf.mxu0
    %v679 = vpop.f32.mrf.mxu0
    %680 = vdwg.mxu0
    %681 = vmatprep.subr.bf16.mxu0 0
    %682 = vmatpush1.bf16.msra.mxu0 %v536
    %683 = vmatprep.subr.bf16.mxu0 0
    %684 = vmatpush1.bf16.msra.mxu0 %v535
    %685 = vmatprep.subr.bf16.mxu0 0
    %686 = vmatpush1.bf16.msra.mxu0 %v534
    %687 = vmatprep.subr.bf16.mxu0 0
    %688 = vmatpush1.bf16.msra.mxu0 %v533
    %689 = vmatprep.subr.bf16.mxu0 0
    %690 = vmatpush1.bf16.msra.mxu0 %v532
    %691 = vmatprep.subr.bf16.mxu0 0
    %692 = vmatpush1.bf16.msra.mxu0 %v531
    %693 = vmatprep.subr.bf16.mxu0 0
    %694 = vmatpush1.bf16.msra.mxu0 %v530
    %695 = vmatprep.subr.bf16.mxu0 0
    %696 = vmatpush1.bf16.msra.mxu0 %v529
    %697 = vmatprep.subr.bf16.mxu0 0
    %698 = vmatpush2.bf16.msra.mxu0 %v544
    %699 = vmatprep.subr.bf16.mxu0 0
    %700 = vmatpush2.bf16.msra.mxu0 %v543
    %701 = vmatprep.subr.bf16.mxu0 0
    %702 = vmatpush2.bf16.msra.mxu0 %v542
    %703 = vmatprep.subr.bf16.mxu0 0
    %704 = vmatpush2.bf16.msra.mxu0 %v541
    %705 = vmatprep.subr.bf16.mxu0 0
    %706 = vmatpush2.bf16.msra.mxu0 %v540
    %707 = vmatprep.subr.bf16.mxu0 0
    %708 = vmatpush2.bf16.msra.mxu0 %v539
    %709 = vmatprep.subr.bf16.mxu0 0
    %710 = vmatpush2.bf16.msra.mxu0 %v538
    %711 = vmatprep.subr.bf16.mxu0 0
    %712 = vmatpush2.bf16.msra.mxu0 %v537
    %713 = vmatprep.mubr.bf16.mxu0 %v244
    %714 = vmatmul.mubr.bf16.gmra.mxu0 %v243
    %v715 = vpop.f32.mrf.mxu0
    %v716 = vadd.f32 %v676, %v715
    %v717 = vpop.f32.mrf.mxu0
    %v718 = vpop.f32.mrf.mxu0
    %v719 = vpop.f32.mrf.mxu0
    %720 = vdwg.mxu0
    %721 = vmatprep.subr.bf16.mxu0 0
    %722 = vmatpush1.bf16.msra.mxu0 %v552
    %723 = vmatprep.subr.bf16.mxu0 0
    %724 = vmatpush1.bf16.msra.mxu0 %v551
    %725 = vmatprep.subr.bf16.mxu0 0
    %726 = vmatpush1.bf16.msra.mxu0 %v550
    %727 = vmatprep.subr.bf16.mxu0 0
    %728 = vmatpush1.bf16.msra.mxu0 %v549
    %729 = vmatprep.subr.bf16.mxu0 0
    %730 = vmatpush1.bf16.msra.mxu0 %v548
    %731 = vmatprep.subr.bf16.mxu0 0
    %732 = vmatpush1.bf16.msra.mxu0 %v547
    %733 = vmatprep.subr.bf16.mxu0 0
    %734 = vmatpush1.bf16.msra.mxu0 %v546
    %735 = vmatprep.subr.bf16.mxu0 0
    %736 = vmatpush1.bf16.msra.mxu0 %v545
    %737 = vmatprep.subr.bf16.mxu0 0
    %738 = vmatpush2.bf16.msra.mxu0 %v560
    %739 = vmatprep.subr.bf16.mxu0 0
    %740 = vmatpush2.bf16.msra.mxu0 %v559
    %741 = vmatprep.subr.bf16.mxu0 0
    %742 = vmatpush2.bf16.msra.mxu0 %v558
    %743 = vmatprep.subr.bf16.mxu0 0
    %744 = vmatpush2.bf16.msra.mxu0 %v557
    %745 = vmatprep.subr.bf16.mxu0 0
    %746 = vmatpush2.bf16.msra.mxu0 %v556
    %747 = vmatprep.subr.bf16.mxu0 0
    %748 = vmatpush2.bf16.msra.mxu0 %v555
    %749 = vmatprep.subr.bf16.mxu0 0
    %750 = vmatpush2.bf16.msra.mxu0 %v554
    %751 = vmatprep.subr.bf16.mxu0 0
    %752 = vmatpush2.bf16.msra.mxu0 %v553
    %753 = vmatprep.mubr.bf16.mxu0 %v246
    %754 = vmatmul.mubr.bf16.gmra.mxu0 %v245
    %v755 = vpop.f32.mrf.mxu0
    %v756 = vadd.f32 %v716, %v755
    %v757 = vpop.f32.mrf.mxu0
    %v758 = vpop.f32.mrf.mxu0
    %v759 = vpop.f32.mrf.mxu0
    %760 = vdwg.mxu0
    %761 = vmatprep.subr.bf16.mxu0 0
    %762 = vmatpush1.bf16.msra.mxu0 %v568
    %763 = vmatprep.subr.bf16.mxu0 0
    %764 = vmatpush1.bf16.msra.mxu0 %v567
    %765 = vmatprep.subr.bf16.mxu0 0
    %766 = vmatpush1.bf16.msra.mxu0 %v566
    %767 = vmatprep.subr.bf16.mxu0 0
    %768 = vmatpush1.bf16.msra.mxu0 %v565
    %769 = vmatprep.subr.bf16.mxu0 0
    %770 = vmatpush1.bf16.msra.mxu0 %v564
    %771 = vmatprep.subr.bf16.mxu0 0
    %772 = vmatpush1.bf16.msra.mxu0 %v563
    %773 = vmatprep.subr.bf16.mxu0 0
    %774 = vmatpush1.bf16.msra.mxu0 %v562
    %775 = vmatprep.subr.bf16.mxu0 0
    %776 = vmatpush1.bf16.msra.mxu0 %v561
    %777 = vmatprep.subr.bf16.mxu0 0
    %778 = vmatpush2.bf16.msra.mxu0 %v576
    %779 = vmatprep.subr.bf16.mxu0 0
    %780 = vmatpush2.bf16.msra.mxu0 %v575
    %781 = vmatprep.subr.bf16.mxu0 0
    %782 = vmatpush2.bf16.msra.mxu0 %v574
    %783 = vmatprep.subr.bf16.mxu0 0
    %784 = vmatpush2.bf16.msra.mxu0 %v573
    %785 = vmatprep.subr.bf16.mxu0 0
    %786 = vmatpush2.bf16.msra.mxu0 %v572
    %787 = vmatprep.subr.bf16.mxu0 0
    %788 = vmatpush2.bf16.msra.mxu0 %v571
    %789 = vmatprep.subr.bf16.mxu0 0
    %790 = vmatpush2.bf16.msra.mxu0 %v570
    %791 = vmatprep.subr.bf16.mxu0 0
    %792 = vmatpush2.bf16.msra.mxu0 %v569
    %793 = vmatprep.mubr.bf16.mxu0 %v248
    %794 = vmatmul.mubr.bf16.gmra.mxu0 %v247
    %v795 = vpop.f32.mrf.mxu0
    %v796 = vadd.f32 %v756, %v795
    %v797 = vpop.f32.mrf.mxu0
    %v798 = vpop.f32.mrf.mxu0
    %v799 = vpop.f32.mrf.mxu0
    %800 = vdwg.mxu0
    %v801 = vmax.f32 %v796, 0.0
    %v802 = vld [vmem:[#allocation5] sm:$0xf]
    %v803 = vld [vmem:[#allocation8] sm:$0xf]
    %v804 = vld [vmem:[#allocation8 + $0x4] sm:$0xf]
    %v805 = vld [vmem:[#allocation8 + $0x8] sm:$0xf]
    %v806 = vld [vmem:[#allocation8 + $0xc] sm:$0xf]
    %v807 = vld [vmem:[#allocation8 + $0x10] sm:$0xf]
    %v808 = vld [vmem:[#allocation8 + $0x14] sm:$0xf]
    %v809 = vld [vmem:[#allocation8 + $0x18] sm:$0xf]
    %v810 = vld [vmem:[#allocation8 + $0x1c] sm:$0xf]
    %v811 = vld [vmem:[#allocation8 + $0x20] sm:$0xf]
    %v812 = vld [vmem:[#allocation8 + $0x24] sm:$0xf]
    %v813 = vld [vmem:[#allocation8 + $0x28] sm:$0xf]
    %v814 = vld [vmem:[#allocation8 + $0x2c] sm:$0xf]
    %v815 = vld [vmem:[#allocation8 + $0x30] sm:$0xf]
    %v816 = vld [vmem:[#allocation8 + $0x34] sm:$0xf]
    %v817 = vld [vmem:[#allocation8 + $0x38] sm:$0xf]
    %v818 = vld [vmem:[#allocation8 + $0x3c] sm:$0xf]
    %v819 = vld [vmem:[%s4 + $0x1] sm:$0x1]
    %v820 = vlaneseq
    %v821 = vshrl.u32 %v820, 7
    %v822 = vsub.s32 0, %v821
    %v823 = vrot.slane %v819, %v822
    %v840 = vunpack.c.l.b16 %v803
    %v841 = vunpack.c.l.b16 %v804
    %v842 = vunpack.c.l.b16 %v805
    %v843 = vunpack.c.l.b16 %v806
    %v844 = vunpack.c.l.b16 %v807
    %v845 = vunpack.c.l.b16 %v808
    %v846 = vunpack.c.l.b16 %v809
    %v847 = vunpack.c.l.b16 %v810
    %v848 = vunpack.c.l.b16 %v811
    %v849 = vunpack.c.l.b16 %v812
    %v850 = vunpack.c.l.b16 %v813
    %v851 = vunpack.c.l.b16 %v814
    %v852 = vunpack.c.l.b16 %v815
    %v853 = vunpack.c.l.b16 %v816
    %v854 = vunpack.c.l.b16 %v817
    %v855 = vunpack.c.l.b16 %v818
    %v856 = vpack.c.b16 %v841, %v840
    %v857 = vpack.c.b16 %v843, %v842
    %v858 = vpack.c.b16 %v845, %v844
    %v859 = vpack.c.b16 %v847, %v846
    %v860 = vpack.c.b16 %v849, %v848
    %v861 = vpack.c.b16 %v851, %v850
    %v862 = vpack.c.b16 %v853, %v852
    %v863 = vpack.c.b16 %v855, %v854
    %872 = vmatprep.subr.bf16.mxu0 0
    %873 = vmatpush1.bf16.msra.mxu0 %v863
    %874 = vmatprep.subr.bf16.mxu0 0
    %875 = vmatpush1.bf16.msra.mxu0 %v862
    %876 = vmatprep.subr.bf16.mxu0 0
    %877 = vmatpush1.bf16.msra.mxu0 %v861
    %878 = vmatprep.subr.bf16.mxu0 0
    %879 = vmatpush1.bf16.msra.mxu0 %v860
    %880 = vmatprep.subr.bf16.mxu0 0
    %881 = vmatpush1.bf16.msra.mxu0 %v859
    %882 = vmatprep.subr.bf16.mxu0 0
    %883 = vmatpush1.bf16.msra.mxu0 %v858
    %884 = vmatprep.subr.bf16.mxu0 0
    %885 = vmatpush1.bf16.msra.mxu0 %v857
    %886 = vmatprep.subr.bf16.mxu0 0
    %887 = vmatpush1.bf16.msra.mxu0 %v856
    %888 = vmatprep.subr.bf16.mxu0 0
    %889 = vmatpush2.bf16.msra.mxu0 0
    %890 = vmatprep.subr.bf16.mxu0 0
    %891 = vmatpush2.bf16.msra.mxu0 0
    %892 = vmatprep.subr.bf16.mxu0 0
    %893 = vmatpush2.bf16.msra.mxu0 0
    %894 = vmatprep.subr.bf16.mxu0 0
    %895 = vmatpush2.bf16.msra.mxu0 0
    %896 = vmatprep.subr.bf16.mxu0 0
    %897 = vmatpush2.bf16.msra.mxu0 0
    %898 = vmatprep.subr.bf16.mxu0 0
    %899 = vmatpush2.bf16.msra.mxu0 0
    %900 = vmatprep.subr.bf16.mxu0 0
    %901 = vmatpush2.bf16.msra.mxu0 0
    %902 = vmatprep.subr.bf16.mxu0 0
    %903 = vmatpush2.bf16.msra.mxu0 0
    %904 = vmatprep.mubr.bf16.mxu0 0
    %905 = vmatmul.mubr.bf16.gmra.mxu0 %v802
    %v906 = vpop.f32.mrf.mxu0
    %v907 = vadd.f32 %v823, %v906
    %v908 = vpop.f32.mrf.mxu0
    %v909 = vpop.f32.mrf.mxu0
    %v910 = vpop.f32.mrf.mxu0
    %911 = vdwg.mxu0
    %v912 = vmax.f32 %v907, 0.0
    %v913 = vld [vmem:[#allocation10] sm:$0xf]
    %v914 = vld [vmem:[#allocation10 + $0x4] sm:$0xf]
    %v915 = vld [vmem:[#allocation10 + $0x8] sm:$0xf]
    %v916 = vld [vmem:[#allocation10 + $0xc] sm:$0xf]
    %v917 = vld [vmem:[#allocation10 + $0x10] sm:$0xf]
    %v918 = vld [vmem:[#allocation10 + $0x14] sm:$0xf]
    %v919 = vld [vmem:[#allocation10 + $0x18] sm:$0xf]
    %v920 = vld [vmem:[#allocation10 + $0x1c] sm:$0xf]
    %v921 = vld [vmem:[#allocation10 + $0x20] sm:$0xf]
    %v922 = vld [vmem:[#allocation10 + $0x24] sm:$0xf]
    %v923 = vld [vmem:[#allocation10 + $0x28] sm:$0xf]
    %v924 = vld [vmem:[#allocation10 + $0x2c] sm:$0xf]
    %v925 = vld [vmem:[#allocation10 + $0x30] sm:$0xf]
    %v926 = vld [vmem:[#allocation10 + $0x34] sm:$0xf]
    %v927 = vld [vmem:[#allocation10 + $0x38] sm:$0xf]
    %v928 = vld [vmem:[#allocation10 + $0x3c] sm:$0xf]
    %v929 = vld [vmem:[%s6] sm:$0x1]
    %v930 = vpack.c.bf16 %v801, %v801
    %v931 = vlaneseq
    %v932 = vshrl.u32 %v931, 7
    %v933 = vsub.s32 0, %v932
    %v934 = vrot.slane %v929, %v933
    %v951 = vunpack.c.l.b16 %v913
    %v952 = vunpack.c.l.b16 %v914
    %v953 = vunpack.c.l.b16 %v915
    %v954 = vunpack.c.l.b16 %v916
    %v955 = vunpack.c.l.b16 %v917
    %v956 = vunpack.c.l.b16 %v918
    %v957 = vunpack.c.l.b16 %v919
    %v958 = vunpack.c.l.b16 %v920
    %v959 = vunpack.c.l.b16 %v921
    %v960 = vunpack.c.l.b16 %v922
    %v961 = vunpack.c.l.b16 %v923
    %v962 = vunpack.c.l.b16 %v924
    %v963 = vunpack.c.l.b16 %v925
    %v964 = vunpack.c.l.b16 %v926
    %v965 = vunpack.c.l.b16 %v927
    %v966 = vunpack.c.l.b16 %v928
    %v967 = vpack.c.b16 %v952, %v951
    %v968 = vpack.c.b16 %v954, %v953
    %v969 = vpack.c.b16 %v956, %v955
    %v970 = vpack.c.b16 %v958, %v957
    %v971 = vpack.c.b16 %v960, %v959
    %v972 = vpack.c.b16 %v962, %v961
    %v973 = vpack.c.b16 %v964, %v963
    %v974 = vpack.c.b16 %v966, %v965
    %983 = vmatprep.subr.bf16.mxu0 0
    %984 = vmatpush1.bf16.msra.mxu0 %v974
    %985 = vmatprep.subr.bf16.mxu0 0
    %986 = vmatpush1.bf16.msra.mxu0 %v973
    %987 = vmatprep.subr.bf16.mxu0 0
    %988 = vmatpush1.bf16.msra.mxu0 %v972
    %989 = vmatprep.subr.bf16.mxu0 0
    %990 = vmatpush1.bf16.msra.mxu0 %v971
    %991 = vmatprep.subr.bf16.mxu0 0
    %992 = vmatpush1.bf16.msra.mxu0 %v970
    %993 = vmatprep.subr.bf16.mxu0 0
    %994 = vmatpush1.bf16.msra.mxu0 %v969
    %995 = vmatprep.subr.bf16.mxu0 0
    %996 = vmatpush1.bf16.msra.mxu0 %v968
    %997 = vmatprep.subr.bf16.mxu0 0
    %998 = vmatpush1.bf16.msra.mxu0 %v967
    %999 = vmatprep.subr.bf16.mxu0 0
    %1000 = vmatpush2.bf16.msra.mxu0 0
    %1001 = vmatprep.subr.bf16.mxu0 0
    %1002 = vmatpush2.bf16.msra.mxu0 0
    %1003 = vmatprep.subr.bf16.mxu0 0
    %1004 = vmatpush2.bf16.msra.mxu0 0
    %1005 = vmatprep.subr.bf16.mxu0 0
    %1006 = vmatpush2.bf16.msra.mxu0 0
    %1007 = vmatprep.subr.bf16.mxu0 0
    %1008 = vmatpush2.bf16.msra.mxu0 0
    %1009 = vmatprep.subr.bf16.mxu0 0
    %1010 = vmatpush2.bf16.msra.mxu0 0
    %1011 = vmatprep.subr.bf16.mxu0 0
    %1012 = vmatpush2.bf16.msra.mxu0 0
    %1013 = vmatprep.subr.bf16.mxu0 0
    %1014 = vmatpush2.bf16.msra.mxu0 0
    %1015 = vmatprep.mubr.bf16.mxu0 0
    %1016 = vmatmul.mubr.bf16.gmra.mxu0 %v930
    %v1017 = vpop.f32.mrf.mxu0
    %v1018 = vadd.f32 %v934, %v1017
    %v1019 = vpop.f32.mrf.mxu0
    %v1020 = vpop.f32.mrf.mxu0
    %v1021 = vpop.f32.mrf.mxu0
    %1022 = vdwg.mxu0
    %v1023 = vmax.f32 %v1018, 0.0
    %s1024 = scalar_lea.vmem [#allocation10], 64
    %v1025 = vld [vmem:[%s1024] sm:$0xf]
    %v1026 = vld [vmem:[%s1024 + $0x4] sm:$0xf]
    %v1027 = vld [vmem:[%s1024 + $0x8] sm:$0xf]
    %v1028 = vld [vmem:[%s1024 + $0xc] sm:$0xf]
    %v1029 = vld [vmem:[%s1024 + $0x10] sm:$0xf]
    %v1030 = vld [vmem:[%s1024 + $0x14] sm:$0xf]
    %v1031 = vld [vmem:[%s1024 + $0x18] sm:$0xf]
    %v1032 = vld [vmem:[%s1024 + $0x1c] sm:$0xf]
    %v1033 = vld [vmem:[%s1024 + $0x20] sm:$0xf]
    %v1034 = vld [vmem:[%s1024 + $0x24] sm:$0xf]
    %v1035 = vld [vmem:[%s1024 + $0x28] sm:$0xf]
    %v1036 = vld [vmem:[%s1024 + $0x2c] sm:$0xf]
    %v1037 = vld [vmem:[%s1024 + $0x30] sm:$0xf]
    %v1038 = vld [vmem:[%s1024 + $0x34] sm:$0xf]
    %v1039 = vld [vmem:[%s1024 + $0x38] sm:$0xf]
    %v1040 = vld [vmem:[%s1024 + $0x3c] sm:$0xf]
    %v1041 = vld [vmem:[%s6 + $0x1] sm:$0x1]
    %v1042 = vpack.c.bf16 %v1023, %v1023
    %v1043 = vlaneseq
    %v1044 = vshrl.u32 %v1043, 7
    %v1045 = vsub.s32 0, %v1044
    %v1046 = vrot.slane %v1041, %v1045
    %v1063 = vunpack.c.l.b16 %v1025
    %v1064 = vunpack.c.l.b16 %v1026
    %v1065 = vunpack.c.l.b16 %v1027
    %v1066 = vunpack.c.l.b16 %v1028
    %v1067 = vunpack.c.l.b16 %v1029
    %v1068 = vunpack.c.l.b16 %v1030
    %v1069 = vunpack.c.l.b16 %v1031
    %v1070 = vunpack.c.l.b16 %v1032
    %v1071 = vunpack.c.l.b16 %v1033
    %v1072 = vunpack.c.l.b16 %v1034
    %v1073 = vunpack.c.l.b16 %v1035
    %v1074 = vunpack.c.l.b16 %v1036
    %v1075 = vunpack.c.l.b16 %v1037
    %v1076 = vunpack.c.l.b16 %v1038
    %v1077 = vunpack.c.l.b16 %v1039
    %v1078 = vunpack.c.l.b16 %v1040
    %v1079 = vpack.c.b16 %v1064, %v1063
    %v1080 = vpack.c.b16 %v1066, %v1065
    %v1081 = vpack.c.b16 %v1068, %v1067
    %v1082 = vpack.c.b16 %v1070, %v1069
    %v1083 = vpack.c.b16 %v1072, %v1071
    %v1084 = vpack.c.b16 %v1074, %v1073
    %v1085 = vpack.c.b16 %v1076, %v1075
    %v1086 = vpack.c.b16 %v1078, %v1077
    %1095 = vmatprep.subr.bf16.mxu0 0
    %1096 = vmatpush1.bf16.msra.mxu0 %v1086
    %1097 = vmatprep.subr.bf16.mxu0 0
    %1098 = vmatpush1.bf16.msra.mxu0 %v1085
    %1099 = vmatprep.subr.bf16.mxu0 0
    %1100 = vmatpush1.bf16.msra.mxu0 %v1084
    %1101 = vmatprep.subr.bf16.mxu0 0
    %1102 = vmatpush1.bf16.msra.mxu0 %v1083
    %1103 = vmatprep.subr.bf16.mxu0 0
    %1104 = vmatpush1.bf16.msra.mxu0 %v1082
    %1105 = vmatprep.subr.bf16.mxu0 0
    %1106 = vmatpush1.bf16.msra.mxu0 %v1081
    %1107 = vmatprep.subr.bf16.mxu0 0
    %1108 = vmatpush1.bf16.msra.mxu0 %v1080
    %1109 = vmatprep.subr.bf16.mxu0 0
    %1110 = vmatpush1.bf16.msra.mxu0 %v1079
    %1111 = vmatprep.subr.bf16.mxu0 0
    %1112 = vmatpush2.bf16.msra.mxu0 0
    %1113 = vmatprep.subr.bf16.mxu0 0
    %1114 = vmatpush2.bf16.msra.mxu0 0
    %1115 = vmatprep.subr.bf16.mxu0 0
    %1116 = vmatpush2.bf16.msra.mxu0 0
    %1117 = vmatprep.subr.bf16.mxu0 0
    %1118 = vmatpush2.bf16.msra.mxu0 0
    %1119 = vmatprep.subr.bf16.mxu0 0
    %1120 = vmatpush2.bf16.msra.mxu0 0
    %1121 = vmatprep.subr.bf16.mxu0 0
    %1122 = vmatpush2.bf16.msra.mxu0 0
    %1123 = vmatprep.subr.bf16.mxu0 0
    %1124 = vmatpush2.bf16.msra.mxu0 0
    %1125 = vmatprep.subr.bf16.mxu0 0
    %1126 = vmatpush2.bf16.msra.mxu0 0
    %1127 = vmatprep.mubr.bf16.mxu0 0
    %1128 = vmatmul.mubr.bf16.gmra.mxu0 %v1042
    %v1129 = vpop.f32.mrf.mxu0
    %v1130 = vadd.f32 %v1046, %v1129
    %v1131 = vpop.f32.mrf.mxu0
    %v1132 = vpop.f32.mrf.mxu0
    %v1133 = vpop.f32.mrf.mxu0
    %1134 = vdwg.mxu0
    %s1135 = scalar_lea.vmem [#allocation10], 128
    %v1136 = vld [vmem:[%s1135] sm:$0xf]
    %v1137 = vld [vmem:[%s1135 + $0x4] sm:$0xf]
    %v1138 = vld [vmem:[%s1135 + $0x8] sm:$0xf]
    %v1139 = vld [vmem:[%s1135 + $0xc] sm:$0xf]
    %v1140 = vld [vmem:[%s1135 + $0x10] sm:$0xf]
    %v1141 = vld [vmem:[%s1135 + $0x14] sm:$0xf]
    %v1142 = vld [vmem:[%s1135 + $0x18] sm:$0xf]
    %v1143 = vld [vmem:[%s1135 + $0x1c] sm:$0xf]
    %v1144 = vld [vmem:[%s1135 + $0x20] sm:$0xf]
    %v1145 = vld [vmem:[%s1135 + $0x24] sm:$0xf]
    %v1146 = vld [vmem:[%s1135 + $0x28] sm:$0xf]
    %v1147 = vld [vmem:[%s1135 + $0x2c] sm:$0xf]
    %v1148 = vld [vmem:[%s1135 + $0x30] sm:$0xf]
    %v1149 = vld [vmem:[%s1135 + $0x34] sm:$0xf]
    %v1150 = vld [vmem:[%s1135 + $0x38] sm:$0xf]
    %v1151 = vld [vmem:[%s1135 + $0x3c] sm:$0xf]
    %v1152 = vld [vmem:[%s6 + $0x2] sm:$0x1]
    %v1153 = vpack.c.bf16 %v912, %v912
    %v1154 = vlaneseq
    %v1155 = vshrl.u32 %v1154, 7
    %v1156 = vsub.s32 0, %v1155
    %v1157 = vrot.slane %v1152, %v1156
    %v1174 = vunpack.c.l.b16 %v1136
    %v1175 = vunpack.c.l.b16 %v1137
    %v1176 = vunpack.c.l.b16 %v1138
    %v1177 = vunpack.c.l.b16 %v1139
    %v1178 = vunpack.c.l.b16 %v1140
    %v1179 = vunpack.c.l.b16 %v1141
    %v1180 = vunpack.c.l.b16 %v1142
    %v1181 = vunpack.c.l.b16 %v1143
    %v1182 = vunpack.c.l.b16 %v1144
    %v1183 = vunpack.c.l.b16 %v1145
    %v1184 = vunpack.c.l.b16 %v1146
    %v1185 = vunpack.c.l.b16 %v1147
    %v1186 = vunpack.c.l.b16 %v1148
    %v1187 = vunpack.c.l.b16 %v1149
    %v1188 = vunpack.c.l.b16 %v1150
    %v1189 = vunpack.c.l.b16 %v1151
    %v1190 = vpack.c.b16 %v1175, %v1174
    %v1191 = vpack.c.b16 %v1177, %v1176
    %v1192 = vpack.c.b16 %v1179, %v1178
    %v1193 = vpack.c.b16 %v1181, %v1180
    %v1194 = vpack.c.b16 %v1183, %v1182
    %v1195 = vpack.c.b16 %v1185, %v1184
    %v1196 = vpack.c.b16 %v1187, %v1186
    %v1197 = vpack.c.b16 %v1189, %v1188
    %1206 = vmatprep.subr.bf16.mxu0 0
    %1207 = vmatpush1.bf16.msra.mxu0 %v1197
    %1208 = vmatprep.subr.bf16.mxu0 0
    %1209 = vmatpush1.bf16.msra.mxu0 %v1196
    %1210 = vmatprep.subr.bf16.mxu0 0
    %1211 = vmatpush1.bf16.msra.mxu0 %v1195
    %1212 = vmatprep.subr.bf16.mxu0 0
    %1213 = vmatpush1.bf16.msra.mxu0 %v1194
    %1214 = vmatprep.subr.bf16.mxu0 0
    %1215 = vmatpush1.bf16.msra.mxu0 %v1193
    %1216 = vmatprep.subr.bf16.mxu0 0
    %1217 = vmatpush1.bf16.msra.mxu0 %v1192
    %1218 = vmatprep.subr.bf16.mxu0 0
    %1219 = vmatpush1.bf16.msra.mxu0 %v1191
    %1220 = vmatprep.subr.bf16.mxu0 0
    %1221 = vmatpush1.bf16.msra.mxu0 %v1190
    %1222 = vmatprep.subr.bf16.mxu0 0
    %1223 = vmatpush2.bf16.msra.mxu0 0
    %1224 = vmatprep.subr.bf16.mxu0 0
    %1225 = vmatpush2.bf16.msra.mxu0 0
    %1226 = vmatprep.subr.bf16.mxu0 0
    %1227 = vmatpush2.bf16.msra.mxu0 0
    %1228 = vmatprep.subr.bf16.mxu0 0
    %1229 = vmatpush2.bf16.msra.mxu0 0
    %1230 = vmatprep.subr.bf16.mxu0 0
    %1231 = vmatpush2.bf16.msra.mxu0 0
    %1232 = vmatprep.subr.bf16.mxu0 0
    %1233 = vmatpush2.bf16.msra.mxu0 0
    %1234 = vmatprep.subr.bf16.mxu0 0
    %1235 = vmatpush2.bf16.msra.mxu0 0
    %1236 = vmatprep.subr.bf16.mxu0 0
    %1237 = vmatpush2.bf16.msra.mxu0 0
    %1238 = vmatprep.mubr.bf16.mxu0 0
    %1239 = vmatmul.mubr.bf16.gmra.mxu0 %v1153
    %v1240 = vpop.f32.mrf.mxu0
    %v1241 = vadd.f32 %v1157, %v1240
    %v1242 = vpop.f32.mrf.mxu0
    %v1243 = vpop.f32.mrf.mxu0
    %v1244 = vpop.f32.mrf.mxu0
    %1245 = vdwg.mxu0
    %v1246 = vmax.f32 %v1241, 0.0
    %s1247 = scalar_lea.vmem [#allocation10], 192
    %v1248 = vld [vmem:[%s1247] sm:$0xf]
    %v1249 = vld [vmem:[%s1247 + $0x4] sm:$0xf]
    %v1250 = vld [vmem:[%s1247 + $0x8] sm:$0xf]
    %v1251 = vld [vmem:[%s1247 + $0xc] sm:$0xf]
    %v1252 = vld [vmem:[%s1247 + $0x10] sm:$0xf]
    %v1253 = vld [vmem:[%s1247 + $0x14] sm:$0xf]
    %v1254 = vld [vmem:[%s1247 + $0x18] sm:$0xf]
    %v1255 = vld [vmem:[%s1247 + $0x1c] sm:$0xf]
    %v1256 = vld [vmem:[%s1247 + $0x20] sm:$0xf]
    %v1257 = vld [vmem:[%s1247 + $0x24] sm:$0xf]
    %v1258 = vld [vmem:[%s1247 + $0x28] sm:$0xf]
    %v1259 = vld [vmem:[%s1247 + $0x2c] sm:$0xf]
    %v1260 = vld [vmem:[%s1247 + $0x30] sm:$0xf]
    %v1261 = vld [vmem:[%s1247 + $0x34] sm:$0xf]
    %v1262 = vld [vmem:[%s1247 + $0x38] sm:$0xf]
    %v1263 = vld [vmem:[%s1247 + $0x3c] sm:$0xf]
    %v1264 = vld [vmem:[%s6 + $0x3] sm:$0x1]
    %v1265 = vpack.c.bf16 %v1246, %v1246
    %v1266 = vlaneseq
    %v1267 = vshrl.u32 %v1266, 7
    %v1268 = vsub.s32 0, %v1267
    %v1269 = vrot.slane %v1264, %v1268
    %v1286 = vunpack.c.l.b16 %v1248
    %v1287 = vunpack.c.l.b16 %v1249
    %v1288 = vunpack.c.l.b16 %v1250
    %v1289 = vunpack.c.l.b16 %v1251
    %v1290 = vunpack.c.l.b16 %v1252
    %v1291 = vunpack.c.l.b16 %v1253
    %v1292 = vunpack.c.l.b16 %v1254
    %v1293 = vunpack.c.l.b16 %v1255
    %v1294 = vunpack.c.l.b16 %v1256
    %v1295 = vunpack.c.l.b16 %v1257
    %v1296 = vunpack.c.l.b16 %v1258
    %v1297 = vunpack.c.l.b16 %v1259
    %v1298 = vunpack.c.l.b16 %v1260
    %v1299 = vunpack.c.l.b16 %v1261
    %v1300 = vunpack.c.l.b16 %v1262
    %v1301 = vunpack.c.l.b16 %v1263
    %v1302 = vpack.c.b16 %v1287, %v1286
    %v1303 = vpack.c.b16 %v1289, %v1288
    %v1304 = vpack.c.b16 %v1291, %v1290
    %v1305 = vpack.c.b16 %v1293, %v1292
    %v1306 = vpack.c.b16 %v1295, %v1294
    %v1307 = vpack.c.b16 %v1297, %v1296
    %v1308 = vpack.c.b16 %v1299, %v1298
    %v1309 = vpack.c.b16 %v1301, %v1300
    %1318 = vmatprep.subr.bf16.mxu0 0
    %1319 = vmatpush1.bf16.msra.mxu0 %v1309
    %1320 = vmatprep.subr.bf16.mxu0 0
    %1321 = vmatpush1.bf16.msra.mxu0 %v1308
    %1322 = vmatprep.subr.bf16.mxu0 0
    %1323 = vmatpush1.bf16.msra.mxu0 %v1307
    %1324 = vmatprep.subr.bf16.mxu0 0
    %1325 = vmatpush1.bf16.msra.mxu0 %v1306
    %1326 = vmatprep.subr.bf16.mxu0 0
    %1327 = vmatpush1.bf16.msra.mxu0 %v1305
    %1328 = vmatprep.subr.bf16.mxu0 0
    %1329 = vmatpush1.bf16.msra.mxu0 %v1304
    %1330 = vmatprep.subr.bf16.mxu0 0
    %1331 = vmatpush1.bf16.msra.mxu0 %v1303
    %1332 = vmatprep.subr.bf16.mxu0 0
    %1333 = vmatpush1.bf16.msra.mxu0 %v1302
    %1334 = vmatprep.subr.bf16.mxu0 0
    %1335 = vmatpush2.bf16.msra.mxu0 0
    %1336 = vmatprep.subr.bf16.mxu0 0
    %1337 = vmatpush2.bf16.msra.mxu0 0
    %1338 = vmatprep.subr.bf16.mxu0 0
    %1339 = vmatpush2.bf16.msra.mxu0 0
    %1340 = vmatprep.subr.bf16.mxu0 0
    %1341 = vmatpush2.bf16.msra.mxu0 0
    %1342 = vmatprep.subr.bf16.mxu0 0
    %1343 = vmatpush2.bf16.msra.mxu0 0
    %1344 = vmatprep.subr.bf16.mxu0 0
    %1345 = vmatpush2.bf16.msra.mxu0 0
    %1346 = vmatprep.subr.bf16.mxu0 0
    %1347 = vmatpush2.bf16.msra.mxu0 0
    %1348 = vmatprep.subr.bf16.mxu0 0
    %1349 = vmatpush2.bf16.msra.mxu0 0
    %1350 = vmatprep.mubr.bf16.mxu0 0
    %1351 = vmatmul.mubr.bf16.gmra.mxu0 %v1265
    %v1352 = vpop.f32.mrf.mxu0
    %v1353 = vadd.f32 %v1269, %v1352
    %v1354 = vpop.f32.mrf.mxu0
    %v1355 = vpop.f32.mrf.mxu0
    %v1356 = vpop.f32.mrf.mxu0
    %1357 = vdwg.mxu0
    %s1358 = scalar_lea.vmem [#allocation10], 256
    %v1359 = vld [vmem:[%s1358] sm:$0xf]
    %v1360 = vld [vmem:[%s1358 + $0x4] sm:$0xf]
    %v1361 = vld [vmem:[%s1358 + $0x8] sm:$0xf]
    %v1362 = vld [vmem:[%s1358 + $0xc] sm:$0xf]
    %v1363 = vld [vmem:[%s1358 + $0x10] sm:$0xf]
    %v1364 = vld [vmem:[%s1358 + $0x14] sm:$0xf]
    %v1365 = vld [vmem:[%s1358 + $0x18] sm:$0xf]
    %v1366 = vld [vmem:[%s1358 + $0x1c] sm:$0xf]
    %v1367 = vld [vmem:[%s1358 + $0x20] sm:$0xf]
    %v1368 = vld [vmem:[%s1358 + $0x24] sm:$0xf]
    %v1369 = vld [vmem:[%s1358 + $0x28] sm:$0xf]
    %v1370 = vld [vmem:[%s1358 + $0x2c] sm:$0xf]
    %v1371 = vld [vmem:[%s1358 + $0x30] sm:$0xf]
    %v1372 = vld [vmem:[%s1358 + $0x34] sm:$0xf]
    %v1373 = vld [vmem:[%s1358 + $0x38] sm:$0xf]
    %v1374 = vld [vmem:[%s1358 + $0x3c] sm:$0xf]
    %v1375 = vld [vmem:[%s6 + $0x4] sm:$0x1]
    %v1376 = vpack.c.bf16 %v1353, %v1130
    %v1377 = vlaneseq
    %v1378 = vshrl.u32 %v1377, 7
    %v1379 = vsub.s32 0, %v1378
    %v1380 = vrot.slane %v1375, %v1379
    %v1397 = vunpack.c.l.b16 %v1359
    %v1398 = vunpack.c.l.b16 %v1360
    %v1399 = vunpack.c.l.b16 %v1361
    %v1400 = vunpack.c.l.b16 %v1362
    %v1401 = vunpack.c.l.b16 %v1363
    %v1402 = vunpack.c.l.b16 %v1364
    %v1403 = vunpack.c.l.b16 %v1365
    %v1404 = vunpack.c.l.b16 %v1366
    %v1405 = vunpack.c.l.b16 %v1367
    %v1406 = vunpack.c.l.b16 %v1368
    %v1407 = vunpack.c.l.b16 %v1369
    %v1408 = vunpack.c.l.b16 %v1370
    %v1409 = vunpack.c.l.b16 %v1371
    %v1410 = vunpack.c.l.b16 %v1372
    %v1411 = vunpack.c.l.b16 %v1373
    %v1412 = vunpack.c.l.b16 %v1374
    %v1413 = vpack.c.b16 %v1398, %v1397
    %v1414 = vpack.c.b16 %v1400, %v1399
    %v1415 = vpack.c.b16 %v1402, %v1401
    %v1416 = vpack.c.b16 %v1404, %v1403
    %v1417 = vpack.c.b16 %v1406, %v1405
    %v1418 = vpack.c.b16 %v1408, %v1407
    %v1419 = vpack.c.b16 %v1410, %v1409
    %v1420 = vpack.c.b16 %v1412, %v1411
    %1429 = vmatprep.subr.bf16.mxu0 0
    %1430 = vmatpush1.bf16.msra.mxu0 %v1420
    %1431 = vmatprep.subr.bf16.mxu0 0
    %1432 = vmatpush1.bf16.msra.mxu0 %v1419
    %1433 = vmatprep.subr.bf16.mxu0 0
    %1434 = vmatpush1.bf16.msra.mxu0 %v1418
    %1435 = vmatprep.subr.bf16.mxu0 0
    %1436 = vmatpush1.bf16.msra.mxu0 %v1417
    %1437 = vmatprep.subr.bf16.mxu0 0
    %1438 = vmatpush1.bf16.msra.mxu0 %v1416
    %1439 = vmatprep.subr.bf16.mxu0 0
    %1440 = vmatpush1.bf16.msra.mxu0 %v1415
    %1441 = vmatprep.subr.bf16.mxu0 0
    %1442 = vmatpush1.bf16.msra.mxu0 %v1414
    %1443 = vmatprep.subr.bf16.mxu0 0
    %1444 = vmatpush1.bf16.msra.mxu0 %v1413
    %1445 = vmatprep.subr.bf16.mxu0 0
    %1446 = vmatpush2.bf16.msra.mxu0 0
    %1447 = vmatprep.subr.bf16.mxu0 0
    %1448 = vmatpush2.bf16.msra.mxu0 0
    %1449 = vmatprep.subr.bf16.mxu0 0
    %1450 = vmatpush2.bf16.msra.mxu0 0
    %1451 = vmatprep.subr.bf16.mxu0 0
    %1452 = vmatpush2.bf16.msra.mxu0 0
    %1453 = vmatprep.subr.bf16.mxu0 0
    %1454 = vmatpush2.bf16.msra.mxu0 0
    %1455 = vmatprep.subr.bf16.mxu0 0
    %1456 = vmatpush2.bf16.msra.mxu0 0
    %1457 = vmatprep.subr.bf16.mxu0 0
    %1458 = vmatpush2.bf16.msra.mxu0 0
    %1459 = vmatprep.subr.bf16.mxu0 0
    %1460 = vmatpush2.bf16.msra.mxu0 0
    %1461 = vmatprep.mubr.bf16.mxu0 0
    %1462 = vmatmul.mubr.bf16.gmra.mxu0 %v1376
    %v1463 = vpop.f32.mrf.mxu0
    %v1464 = vadd.f32 %v1380, %v1463
    %v1465 = vpop.f32.mrf.mxu0
    %v1466 = vpop.f32.mrf.mxu0
    %v1467 = vadd.f32 %v1380, %v1466
    %v1468 = vpop.f32.mrf.mxu0
    %1469 = vdwg.mxu0
    %v1470 = vmax.f32 %v1464, 0.0
    %v1471 = vmax.f32 %v1467, 0.0
    %s1472 = scalar_lea.vmem [#allocation10], 320
    %v1473 = vld [vmem:[%s1472] sm:$0xf]
    %v1474 = vld [vmem:[%s1472 + $0x4] sm:$0xf]
    %v1475 = vld [vmem:[%s1472 + $0x8] sm:$0xf]
    %v1476 = vld [vmem:[%s1472 + $0xc] sm:$0xf]
    %v1477 = vld [vmem:[%s1472 + $0x10] sm:$0xf]
    %v1478 = vld [vmem:[%s1472 + $0x14] sm:$0xf]
    %v1479 = vld [vmem:[%s1472 + $0x18] sm:$0xf]
    %v1480 = vld [vmem:[%s1472 + $0x1c] sm:$0xf]
    %v1481 = vld [vmem:[%s1472 + $0x20] sm:$0xf]
    %v1482 = vld [vmem:[%s1472 + $0x24] sm:$0xf]
    %v1483 = vld [vmem:[%s1472 + $0x28] sm:$0xf]
    %v1484 = vld [vmem:[%s1472 + $0x2c] sm:$0xf]
    %v1485 = vld [vmem:[%s1472 + $0x30] sm:$0xf]
    %v1486 = vld [vmem:[%s1472 + $0x34] sm:$0xf]
    %v1487 = vld [vmem:[%s1472 + $0x38] sm:$0xf]
    %v1488 = vld [vmem:[%s1472 + $0x3c] sm:$0xf]
    %v1489 = vld [vmem:[%s6 + $0x5] sm:$0x1]
    %v1490 = vpack.c.bf16 %v1470, %v1470
    %v1491 = vlaneseq
    %v1492 = vshrl.u32 %v1491, 7
    %v1493 = vsub.s32 0, %v1492
    %v1494 = vrot.slane %v1489, %v1493
    %v1511 = vunpack.c.l.b16 %v1473
    %v1512 = vunpack.c.l.b16 %v1474
    %v1513 = vunpack.c.l.b16 %v1475
    %v1514 = vunpack.c.l.b16 %v1476
    %v1515 = vunpack.c.l.b16 %v1477
    %v1516 = vunpack.c.l.b16 %v1478
    %v1517 = vunpack.c.l.b16 %v1479
    %v1518 = vunpack.c.l.b16 %v1480
    %v1519 = vunpack.c.l.b16 %v1481
    %v1520 = vunpack.c.l.b16 %v1482
    %v1521 = vunpack.c.l.b16 %v1483
    %v1522 = vunpack.c.l.b16 %v1484
    %v1523 = vunpack.c.l.b16 %v1485
    %v1524 = vunpack.c.l.b16 %v1486
    %v1525 = vunpack.c.l.b16 %v1487
    %v1526 = vunpack.c.l.b16 %v1488
    %v1527 = vpack.c.b16 %v1512, %v1511
    %v1528 = vpack.c.b16 %v1514, %v1513
    %v1529 = vpack.c.b16 %v1516, %v1515
    %v1530 = vpack.c.b16 %v1518, %v1517
    %v1531 = vpack.c.b16 %v1520, %v1519
    %v1532 = vpack.c.b16 %v1522, %v1521
    %v1533 = vpack.c.b16 %v1524, %v1523
    %v1534 = vpack.c.b16 %v1526, %v1525
    %1543 = vmatprep.subr.bf16.mxu0 0
    %1544 = vmatpush1.bf16.msra.mxu0 %v1534
    %1545 = vmatprep.subr.bf16.mxu0 0
    %1546 = vmatpush1.bf16.msra.mxu0 %v1533
    %1547 = vmatprep.subr.bf16.mxu0 0
    %1548 = vmatpush1.bf16.msra.mxu0 %v1532
    %1549 = vmatprep.subr.bf16.mxu0 0
    %1550 = vmatpush1.bf16.msra.mxu0 %v1531
    %1551 = vmatprep.subr.bf16.mxu0 0
    %1552 = vmatpush1.bf16.msra.mxu0 %v1530
    %1553 = vmatprep.subr.bf16.mxu0 0
    %1554 = vmatpush1.bf16.msra.mxu0 %v1529
    %1555 = vmatprep.subr.bf16.mxu0 0
    %1556 = vmatpush1.bf16.msra.mxu0 %v1528
    %1557 = vmatprep.subr.bf16.mxu0 0
    %1558 = vmatpush1.bf16.msra.mxu0 %v1527
    %1559 = vmatprep.subr.bf16.mxu0 0
    %1560 = vmatpush2.bf16.msra.mxu0 0
    %1561 = vmatprep.subr.bf16.mxu0 0
    %1562 = vmatpush2.bf16.msra.mxu0 0
    %1563 = vmatprep.subr.bf16.mxu0 0
    %1564 = vmatpush2.bf16.msra.mxu0 0
    %1565 = vmatprep.subr.bf16.mxu0 0
    %1566 = vmatpush2.bf16.msra.mxu0 0
    %1567 = vmatprep.subr.bf16.mxu0 0
    %1568 = vmatpush2.bf16.msra.mxu0 0
    %1569 = vmatprep.subr.bf16.mxu0 0
    %1570 = vmatpush2.bf16.msra.mxu0 0
    %1571 = vmatprep.subr.bf16.mxu0 0
    %1572 = vmatpush2.bf16.msra.mxu0 0
    %1573 = vmatprep.subr.bf16.mxu0 0
    %1574 = vmatpush2.bf16.msra.mxu0 0
    %1575 = vmatprep.mubr.bf16.mxu0 0
    %1576 = vmatmul.mubr.bf16.gmra.mxu0 %v1490
    %v1577 = vpop.f32.mrf.mxu0
    %v1578 = vadd.f32 %v1494, %v1577
    %v1579 = vpop.f32.mrf.mxu0
    %v1580 = vpop.f32.mrf.mxu0
    %v1581 = vpop.f32.mrf.mxu0
    %1582 = vdwg.mxu0
    %s1583 = scalar_lea.vmem [#allocation10], 384
    %v1584 = vld [vmem:[%s1583] sm:$0xf]
    %v1585 = vld [vmem:[%s1583 + $0x4] sm:$0xf]
    %v1586 = vld [vmem:[%s1583 + $0x8] sm:$0xf]
    %v1587 = vld [vmem:[%s1583 + $0xc] sm:$0xf]
    %v1588 = vld [vmem:[%s1583 + $0x10] sm:$0xf]
    %v1589 = vld [vmem:[%s1583 + $0x14] sm:$0xf]
    %v1590 = vld [vmem:[%s1583 + $0x18] sm:$0xf]
    %v1591 = vld [vmem:[%s1583 + $0x1c] sm:$0xf]
    %v1592 = vld [vmem:[%s1583 + $0x20] sm:$0xf]
    %v1593 = vld [vmem:[%s1583 + $0x24] sm:$0xf]
    %v1594 = vld [vmem:[%s1583 + $0x28] sm:$0xf]
    %v1595 = vld [vmem:[%s1583 + $0x2c] sm:$0xf]
    %v1596 = vld [vmem:[%s1583 + $0x30] sm:$0xf]
    %v1597 = vld [vmem:[%s1583 + $0x34] sm:$0xf]
    %v1598 = vld [vmem:[%s1583 + $0x38] sm:$0xf]
    %v1599 = vld [vmem:[%s1583 + $0x3c] sm:$0xf]
    %v1600 = vld [vmem:[%s6 + $0x6] sm:$0x1]
    %v1601 = vpack.c.bf16 %v1471, %v1471
    %v1602 = vlaneseq
    %v1603 = vshrl.u32 %v1602, 7
    %v1604 = vsub.s32 0, %v1603
    %v1605 = vrot.slane %v1600, %v1604
    %v1622 = vunpack.c.l.b16 %v1584
    %v1623 = vunpack.c.l.b16 %v1585
    %v1624 = vunpack.c.l.b16 %v1586
    %v1625 = vunpack.c.l.b16 %v1587
    %v1626 = vunpack.c.l.b16 %v1588
    %v1627 = vunpack.c.l.b16 %v1589
    %v1628 = vunpack.c.l.b16 %v1590
    %v1629 = vunpack.c.l.b16 %v1591
    %v1630 = vunpack.c.l.b16 %v1592
    %v1631 = vunpack.c.l.b16 %v1593
    %v1632 = vunpack.c.l.b16 %v1594
    %v1633 = vunpack.c.l.b16 %v1595
    %v1634 = vunpack.c.l.b16 %v1596
    %v1635 = vunpack.c.l.b16 %v1597
    %v1636 = vunpack.c.l.b16 %v1598
    %v1637 = vunpack.c.l.b16 %v1599
    %v1638 = vpack.c.b16 %v1623, %v1622
    %v1639 = vpack.c.b16 %v1625, %v1624
    %v1640 = vpack.c.b16 %v1627, %v1626
    %v1641 = vpack.c.b16 %v1629, %v1628
    %v1642 = vpack.c.b16 %v1631, %v1630
    %v1643 = vpack.c.b16 %v1633, %v1632
    %v1644 = vpack.c.b16 %v1635, %v1634
    %v1645 = vpack.c.b16 %v1637, %v1636
    %1654 = vmatprep.subr.bf16.mxu0 0
    %1655 = vmatpush1.bf16.msra.mxu0 %v1645
    %1656 = vmatprep.subr.bf16.mxu0 0
    %1657 = vmatpush1.bf16.msra.mxu0 %v1644
    %1658 = vmatprep.subr.bf16.mxu0 0
    %1659 = vmatpush1.bf16.msra.mxu0 %v1643
    %1660 = vmatprep.subr.bf16.mxu0 0
    %1661 = vmatpush1.bf16.msra.mxu0 %v1642
    %1662 = vmatprep.subr.bf16.mxu0 0
    %1663 = vmatpush1.bf16.msra.mxu0 %v1641
    %1664 = vmatprep.subr.bf16.mxu0 0
    %1665 = vmatpush1.bf16.msra.mxu0 %v1640
    %1666 = vmatprep.subr.bf16.mxu0 0
    %1667 = vmatpush1.bf16.msra.mxu0 %v1639
    %1668 = vmatprep.subr.bf16.mxu0 0
    %1669 = vmatpush1.bf16.msra.mxu0 %v1638
    %1670 = vmatprep.subr.bf16.mxu0 0
    %1671 = vmatpush2.bf16.msra.mxu0 0
    %1672 = vmatprep.subr.bf16.mxu0 0
    %1673 = vmatpush2.bf16.msra.mxu0 0
    %1674 = vmatprep.subr.bf16.mxu0 0
    %1675 = vmatpush2.bf16.msra.mxu0 0
    %1676 = vmatprep.subr.bf16.mxu0 0
    %1677 = vmatpush2.bf16.msra.mxu0 0
    %1678 = vmatprep.subr.bf16.mxu0 0
    %1679 = vmatpush2.bf16.msra.mxu0 0
    %1680 = vmatprep.subr.bf16.mxu0 0
    %1681 = vmatpush2.bf16.msra.mxu0 0
    %1682 = vmatprep.subr.bf16.mxu0 0
    %1683 = vmatpush2.bf16.msra.mxu0 0
    %1684 = vmatprep.subr.bf16.mxu0 0
    %1685 = vmatpush2.bf16.msra.mxu0 0
    %1686 = vmatprep.mubr.bf16.mxu0 0
    %1687 = vmatmul.mubr.bf16.gmra.mxu0 %v1601
    %v1688 = vpop.f32.mrf.mxu0
    %v1689 = vadd.f32 %v1605, %v1688
    %v1690 = vpop.f32.mrf.mxu0
    %v1691 = vpop.f32.mrf.mxu0
    %v1692 = vpop.f32.mrf.mxu0
    %1693 = vdwg.mxu0
    %1694 = vst [vmem:[#allocation11] sm:$0xff] %v1578
    %1695 = vst [vmem:[#allocation11 + $0x8] sm:$0xff] %v1689
    // Predicated region
    $region50: #{tpu_custom_call.1} parent=1 // pred_check
      _
    $region51: #{tpu_custom_call.1} parent=1 // pred_check_branch
      %1697 = sbr.rel (0) target = $region53
    $region52: #{tpu_custom_call.1} parent=1 // pred_region
      %s1699 = ssub.s32 256, 256
      %1700 = vsyncadd [#allocation4], %s1699
      %s1701 = sshll.u32 [#allocation11], 4
      %s1702 = int_to_ptr.vmem [resolvable:$true] %s1701
      %1707 = dma.vmem_to_hbm [thread:$0]  %s1702, 256, %s7, [#allocation4], 128, 128, 8
    $region53: #{tpu_custom_call.1} parent=1 // pred_fallthru
      _
    // Predicated region
    $region54: #{tpu_custom_call.1} parent=1 // pred_check
      _
    $region55: #{tpu_custom_call.1} parent=1 // pred_check_branch
      %1709 = sbr.rel (0) target = $region57
    $region56: #{tpu_custom_call.1} parent=1 // pred_region
      %1710 = dma.done [#allocation4], 256
    $region57: #{tpu_custom_call.1} parent=1 // pred_fallthru
      _
    %1711 = vsyncpa [#allocation3], 1
    %1712 = vsyncpa [#allocation6], 1
    %1713 = vsyncpa [#allocation9], 1
    %1714 = vsyncpa [#allocation4], 1

</llo_original>
